<compile_context>
chip_gen: v5e
topology: v5e:2x2
jax: 0.10.0
libtpu: 0.0.40
codegen_flags: <defaults>
</compile_context>

<pallas_src>
import functools
import numpy as np
import jax
import jax.numpy as jnp
from jax import lax
from jax.experimental import pallas as pl
from jax.experimental.pallas import tpu as pltpu

PRIMITIVES = ("conv_3x3", "conv_5x5", "skip_s2d")
NUM_PRIMITIVES = len(PRIMITIVES)


def _space_to_depth(x):
    n, h, w, c = x.shape
    ho, wo = h // 2, w // 2
    return (x.reshape(n, ho, 2, wo, 2, c)
             .transpose(0, 1, 3, 2, 4, 5)
             .reshape(n, ho, wo, 4 * c))


# ---------------------------------------------------------------------------
# Pallas kernel: one MixedOp grid step.
# Per image in the block (flattened, padded s2d rows slab of shape (Q+2, 4Cin)):
#   out[r] = sum_{dh,dw} relu(slab)[r + dh*Wp + dw] @ W_s2d[3dh+dw]        (conv)
#            + a_skip * slab[r + Wp + 1]                                   (skip)
# for r in [0, Ho*Wp); the 2 pad columns per output row are discarded by the
# wrapper.  W_s2d already contains alpha[0]*W3 + alpha[1]*W5 rebased into the
# space-to-depth basis; a_skip = alpha[2].
# ---------------------------------------------------------------------------
def _mixed_step_kernel(ask_ref, xs_ref, w_ref, out_ref, *, m, wp, c4, tn):
    a_sk = ask_ref[0]
    nb = xs_ref.shape[0]
    for b in range(nb):                       # static unroll over images in this block
        slab = xs_ref[b]                      # (Q+2, 4Cin) bf16, pre-ReLU s2d rows
        xr = jnp.maximum(slab, 0)             # ReLU once per element (no 25x duplication)
        # skip op = space-to-depth(pre-ReLU x) == centre-tap row window of the slab;
        # channel layout matches the output layout by construction.
        if tn == c4:
            skip = slab[wp + 1: wp + 1 + m, :]
        else:                                 # Cout tiled: this tile's (128-aligned) channels
            j = pl.program_id(0)
            start = pl.multiple_of(j * tn, tn)
            skip = xs_ref[b, pl.ds(wp + 1, m), pl.ds(start, tn)]
        acc = a_sk * skip.astype(jnp.float32)
        # alpha-folded 5x5(+3x3) stride-2 conv == 9 row-shifted matmuls (f32 acc).
        for dh in range(3):
            for dw in range(3):
                off = dh * wp + dw
                tap = xr[off: off + m, :]
                acc = acc + jnp.dot(tap, w_ref[3 * dh + dw],
                                    preferred_element_type=jnp.float32)
        out_ref[b] = acc.astype(out_ref.dtype)


# ---------------------------------------------------------------------------
# Tiling / VMEM helpers
# ---------------------------------------------------------------------------
def _vmem_budget():
    cap = 128 * 1024 * 1024
    try:
        info = pltpu.get_tpu_info()
        cap = int(getattr(info, "vmem_capacity_bytes", cap) or cap)
    except Exception:  # not queryable: assume a 128 MiB part
        pass
    # leave headroom for Mosaic internal scratch / in-kernel temporaries
    return (44 if cap <= 64 * 1024 * 1024 else 96) * 1024 * 1024


def _vmem_need(nb, q2, m, c4, tn):
    """Rough per-grid-step VMEM footprint (bytes); weight counted double-buffered."""
    need = 2 * nb * q2 * c4 * 2            # xs block, double-buffered, bf16
    need += 2 * 9 * c4 * tn * 2            # weight block (conservatively x2)
    need += 2 * nb * m * tn * 2            # out block, double-buffered, bf16
    need += 2 * q2 * c4 * 2                # slab + relu'd slab values
    need += 2 * m * c4 * 2                 # live tap slices
    need += 2 * m * tn * 4                 # f32 accumulator + skip term
    return need


def _choose_tiling(n, q2, m, c4, cout, budget):
    # batch tile: amortize the ~0.35us/grid-step overhead for large batches while
    # keeping plenty of grid steps for megacore sharding.
    nb = max(1, min(8, n // 8))
    tn_cands = [cout] + [t for t in (2048, 1024, 512, 256, 128)
                         if t < cout and cout % t == 0]
    while True:
        for tn in tn_cands:
            if _vmem_need(nb, q2, m, c4, tn) * 13 // 10 <= budget:
                return nb, tn, cout // tn
        if nb == 1:
            break
        nb = max(1, nb // 2)
    # TODO(synk): extreme Cin would additionally need K (tap/channel) tiling with
    # an f32 accumulator scratch; not required for this search space's sizes.
    tn = tn_cands[-1]
    return 1, tn, cout // tn


# ---------------------------------------------------------------------------
# JAX glue: one MixedOp.  x: (N,H,W,Cin) -> (N,H/2,W/2,4Cin), bf16 out.
# ---------------------------------------------------------------------------
def mixed_op(x, w3, w5, alpha):
    N, H, W, Cin = x.shape
    assert H % 2 == 0 and W % 2 == 0, "stride-2 ops require even spatial dims"
    Ho, Wo = H // 2, W // 2
    Hp, Wp = Ho + 2, Wo + 2
    Cout = C4 = 4 * Cin
    M = Ho * Wp                 # rows computed per image (2 discarded pad cols per row)
    Q = Hp * Wp
    Q2 = Q + 2                  # +2 halo rows so the discarded tail outputs stay in-bounds
    alpha = alpha.astype(jnp.float32)

    # Activations: pad + space-to-depth + row-flatten -- a 1:1 HBM rearrangement
    # (no im2col, no duplication), bf16.
    xp = jnp.pad(x, ((0, 0), (2, 2), (2, 2), (0, 0)))
    xs = _space_to_depth(xp).astype(jnp.bfloat16)            # (N, Hp, Wp, 4Cin)
    xs = xs.reshape(N, Q, C4)
    xs = jnp.pad(xs, ((0, 0), (0, Q2 - Q), (0, 0)))

    # Weights: fold alpha, rebase the 5x5 (+ centred 3x3) stride-2 kernel into the
    # space-to-depth basis: 9 taps of (4Cin, Cout); invalid taps (kh=5 / kw=5) are zero.
    w3p = jnp.pad(w3, ((1, 1), (1, 1), (0, 0), (0, 0)))       # 3x3 -> centred 5x5
    w_comb = alpha[0] * w3p + alpha[1] * w5                   # (5,5,Cin,Cout) f32
    w_comb = jnp.pad(w_comb, ((0, 1), (0, 1), (0, 0), (0, 0)))
    w_s2d = (w_comb.reshape(3, 2, 3, 2, Cin, Cout)            # (dh,ph,dw,pw,Cin,Cout)
                   .transpose(0, 2, 1, 3, 4, 5)               # (dh,dw,ph,pw,Cin,Cout)
                   .reshape(9, C4, Cout)
                   .astype(jnp.bfloat16))
    a_skip = alpha[2:3]                                       # (1,) f32 -> SMEM

    budget = _vmem_budget()
    nb, tn, nj = _choose_tiling(N, Q2, M, C4, Cout, budget)
    n_pad = -(-N // nb) * nb
    if n_pad != N:
        xs = jnp.pad(xs, ((0, n_pad - N), (0, 0), (0, 0)))
    grid_bt = n_pad // nb

    w_bytes = 9 * C4 * tn * 2
    if nj == 1:
        grid = (grid_bt,)
        xs_spec = pl.BlockSpec((nb, Q2, C4), lambda b: (b, 0, 0))
        w_idx = lambda b: (0, 0, 0)
        if w_bytes >= (1 << 20):
            # constant-index weight: single-buffer it to halve its VMEM footprint
            try:
                w_spec = pl.BlockSpec((9, C4, tn), w_idx, pipeline_mode=pl.Buffered(1))
            except TypeError:   # Pallas version without pipeline_mode
                w_spec = pl.BlockSpec((9, C4, tn), w_idx)
        else:
            w_spec = pl.BlockSpec((9, C4, tn), w_idx)
        out_spec = pl.BlockSpec((nb, M, tn), lambda b: (b, 0, 0))
        sems = ("parallel",)
    else:
        # Cout is tiled: put the Cout axis OUTER so the large weight tile stays
        # VMEM-resident across the whole batch (weight streamed from HBM once);
        # the small activation slab is cheap to re-stream nj times.
        grid = (nj, grid_bt)
        xs_spec = pl.BlockSpec((nb, Q2, C4), lambda j, b: (b, 0, 0))
        w_spec = pl.BlockSpec((9, C4, tn), lambda j, b: (0, 0, j))
        out_spec = pl.BlockSpec((nb, M, tn), lambda j, b: (b, 0, j))
        sems = ("parallel", "arbitrary")

    need = _vmem_need(nb, Q2, M, C4, tn) * 13 // 10
    vmem_limit = None
    if need > 24 * 2 ** 20:
        vmem_limit = int(min(max(need * 3 // 2, 32 * 2 ** 20), budget))

    cost = pl.CostEstimate(
        flops=2 * n_pad * M * 9 * C4 * Cout + 2 * n_pad * M * Cout,
        transcendentals=0,
        bytes_accessed=(n_pad * Q2 * C4 * 2 * nj
                        + 9 * C4 * Cout * 2
                        + n_pad * M * Cout * 2),
    )

    out = pl.pallas_call(
        functools.partial(_mixed_step_kernel, m=M, wp=Wp, c4=C4, tn=tn),
        out_shape=jax.ShapeDtypeStruct((n_pad, M, Cout), jnp.bfloat16),
        grid_spec=pltpu.PrefetchScalarGridSpec(
            num_scalar_prefetch=0,
            grid=grid,
            in_specs=[
                pl.BlockSpec(memory_space=pltpu.MemorySpace.SMEM),  # a_skip (1,)
                xs_spec,                                            # s2d rows (bf16)
                w_spec,                                             # folded weights (bf16)
            ],
            out_specs=out_spec,
        ),
        compiler_params=pltpu.CompilerParams(
            dimension_semantics=sems,
            vmem_limit_bytes=vmem_limit),
        cost_estimate=cost,
    )(a_skip, xs, w_s2d)

    # drop batch padding and the 2 discarded pad columns per output row
    out = out[:N].reshape(N, Ho, Wp, Cout)[:, :, :Wo, :]
    return out


def init_cell_params(key, steps, C):
    params = []
    for i in range(steps):
        cin = C * 4 ** i
        cout = 4 * cin
        key, k3, k5 = jax.random.split(key, 3)
        params.append({
            "w3": jax.random.normal(k3, (3, 3, cin, cout), jnp.float32) / np.sqrt(9 * cin),
            "w5": jax.random.normal(k5, (5, 5, cin, cout), jnp.float32) / np.sqrt(25 * cin),
        })
    return params


def cell_forward(s0_nchw, params, weights):
    """Cell.forward: s0 = ops[i](s0, weights[i]) for i in range(steps).  NCHW in/out."""
    x = jnp.transpose(s0_nchw, (0, 2, 3, 1)).astype(jnp.float32)   # NCHW -> NHWC
    for i, p in enumerate(params):
        x = mixed_op(x, p["w3"], p["w5"], weights[i])              # bf16 between steps
    return jnp.transpose(x, (0, 3, 1, 2)).astype(jnp.float32)      # NHWC -> NCHW


# ---------------------------------------------------------------------------
# Pure-JAX reference (correctness validation only; full f32).
# ---------------------------------------------------------------------------
def _ref_mixed_op(x, w3, w5, alpha):
    xr = jnp.maximum(x, 0.0)
    dn = ("NHWC", "HWIO", "NHWC")
    y3 = lax.conv_general_dilated(xr, w3, (2, 2), ((1, 1), (1, 1)),
                                  dimension_numbers=dn,
                                  precision=lax.Precision.HIGHEST)
    y5 = lax.conv_general_dilated(xr, w5, (2, 2), ((2, 2), (2, 2)),
                                  dimension_numbers=dn,
                                  precision=lax.Precision.HIGHEST)
    return alpha[0] * y3 + alpha[1] * y5 + alpha[2] * _space_to_depth(x)


def _ref_cell(s0_nchw, params, weights):
    x = jnp.transpose(s0_nchw, (0, 2, 3, 1)).astype(jnp.float32)
    for i, p in enumerate(params):
        x = _ref_mixed_op(x, p["w3"], p["w5"], weights[i])
    return jnp.transpose(x, (0, 3, 1, 2))


if __name__ == "__main__":
    key = jax.random.PRNGKey(0)
    N, C, H, W = 2, 4, 16, 16
    steps = 2

    k_x, k_a, k_p = jax.random.split(key, 3)
    s0 = jax.random.normal(k_x, (N, C, H, W), jnp.float32)                  # NCHW input
    arch = jax.random.normal(k_a, (steps, NUM_PRIMITIVES), jnp.float32)
    weights = jax.nn.softmax(arch, axis=-1)                                  # (steps, num_primitives)
    params = init_cell_params(k_p, steps, C)

    out = jax.jit(cell_forward)(s0, params, weights)
    out = jax.block_until_ready(out)

    assert out.shape == (N, C * 4 ** steps, H // 2 ** steps, W // 2 ** steps)
    ref = _ref_cell(s0, params, weights)
    # bf16 activations/weights (f32 MXU accumulation) across two chained steps
    # vs. an f32 reference -> loose-but-meaningful tolerance.
    np.testing.assert_allclose(np.asarray(out), np.asarray(ref), rtol=5e-2, atol=5e-2)
    print("KERNEL_OK")
</pallas_src>

<mosaic_0001>
module attributes {stable_mosaic.version = 11 : i64} {
  func.func @_mixed_step_kernel(%arg0: i32, %arg1: memref<1xf32, #tpu.memory_space<smem>>, %arg2: memref<1x102x16xbf16, #tpu.memory_space<vmem>>, %arg3: memref<9x16x16xbf16, #tpu.memory_space<vmem>>, %arg4: memref<1x80x16xbf16, #tpu.memory_space<vmem>>) attributes {dimension_semantics = [#tpu.dimension_semantics<parallel>], iteration_bounds = array<i64: 2>, scalar_prefetch = 0 : i64, scratch_operands = 0 : i64, tpu.core_type = #tpu.core_type<tc>, window_params = [{transform_indices = @transform_0, window_bounds = array<i64: 1>}, {transform_indices = @transform_1, window_bounds = array<i64: 1, 102, 16>}, {pipeline_mode = #tpu.pipeline_mode<synchronous>, transform_indices = @transform_2, window_bounds = array<i64: 9, 16, 16>}, {transform_indices = @transform_3, window_bounds = array<i64: 1, 80, 16>}]} {
    %c0 = arith.constant 0 : index
    %0 = memref.load %arg1[%c0] : memref<1xf32, #tpu.memory_space<smem>>
    %c0_0 = arith.constant 0 : index
    %c0_1 = arith.constant 0 : index
    %c0_2 = arith.constant 0 : index
    %1 = vector.load %arg2[%c0_0, %c0_1, %c0_2] : memref<1x102x16xbf16, #tpu.memory_space<vmem>>, vector<1x102x16xbf16>
    %2 = vector.shape_cast %1 : vector<1x102x16xbf16> to vector<102x16xbf16>
    %cst = arith.constant 0.000000e+00 : bf16
    %3 = vector.broadcast %cst : bf16 to vector<102x16xbf16>
    %4 = arith.maximumf %2, %3 : vector<102x16xbf16>
    %5 = vector.extract_strided_slice %2 {offsets = [11, 0], sizes = [80, 16], strides = [1, 1]} : vector<102x16xbf16> to vector<80x16xbf16>
    %6 = arith.extf %5 : vector<80x16xbf16> to vector<80x16xf32>
    %7 = vector.broadcast %0 : f32 to vector<80x16xf32>
    %8 = arith.mulf %7, %6 : vector<80x16xf32>
    %9 = vector.extract_strided_slice %4 {offsets = [0, 0], sizes = [80, 16], strides = [1, 1]} : vector<102x16xbf16> to vector<80x16xbf16>
    %c0_3 = arith.constant 0 : index
    %c0_4 = arith.constant 0 : index
    %c0_5 = arith.constant 0 : index
    %10 = vector.load %arg3[%c0_3, %c0_4, %c0_5] : memref<9x16x16xbf16, #tpu.memory_space<vmem>>, vector<1x16x16xbf16>
    %11 = vector.shape_cast %10 : vector<1x16x16xbf16> to vector<16x16xbf16>
    %cst_6 = arith.constant dense<0.000000e+00> : vector<80x16xf32>
    %12 = tpu.matmul %9, %11, %cst_6 {dimension_numbers = #tpu.dot_dimension_numbers<[1], [0], [0], [1], [0, 0, 1, 1], [], []>} : vector<80x16xbf16>, vector<16x16xbf16>, vector<80x16xf32> -> vector<80x16xf32>
    %13 = arith.addf %8, %12 : vector<80x16xf32>
    %14 = vector.extract_strided_slice %4 {offsets = [1, 0], sizes = [80, 16], strides = [1, 1]} : vector<102x16xbf16> to vector<80x16xbf16>
    %c1 = arith.constant 1 : index
    %c0_7 = arith.constant 0 : index
    %c0_8 = arith.constant 0 : index
    %15 = vector.load %arg3[%c1, %c0_7, %c0_8] : memref<9x16x16xbf16, #tpu.memory_space<vmem>>, vector<1x16x16xbf16>
    %16 = vector.shape_cast %15 : vector<1x16x16xbf16> to vector<16x16xbf16>
    %cst_9 = arith.constant dense<0.000000e+00> : vector<80x16xf32>
    %17 = tpu.matmul %14, %16, %cst_9 {dimension_numbers = #tpu.dot_dimension_numbers<[1], [0], [0], [1], [0, 0, 1, 1], [], []>} : vector<80x16xbf16>, vector<16x16xbf16>, vector<80x16xf32> -> vector<80x16xf32>
    %18 = arith.addf %13, %17 : vector<80x16xf32>
    %19 = vector.extract_strided_slice %4 {offsets = [2, 0], sizes = [80, 16], strides = [1, 1]} : vector<102x16xbf16> to vector<80x16xbf16>
    %c2 = arith.constant 2 : index
    %c0_10 = arith.constant 0 : index
    %c0_11 = arith.constant 0 : index
    %20 = vector.load %arg3[%c2, %c0_10, %c0_11] : memref<9x16x16xbf16, #tpu.memory_space<vmem>>, vector<1x16x16xbf16>
    %21 = vector.shape_cast %20 : vector<1x16x16xbf16> to vector<16x16xbf16>
    %cst_12 = arith.constant dense<0.000000e+00> : vector<80x16xf32>
    %22 = tpu.matmul %19, %21, %cst_12 {dimension_numbers = #tpu.dot_dimension_numbers<[1], [0], [0], [1], [0, 0, 1, 1], [], []>} : vector<80x16xbf16>, vector<16x16xbf16>, vector<80x16xf32> -> vector<80x16xf32>
    %23 = arith.addf %18, %22 : vector<80x16xf32>
    %24 = vector.extract_strided_slice %4 {offsets = [10, 0], sizes = [80, 16], strides = [1, 1]} : vector<102x16xbf16> to vector<80x16xbf16>
    %c3 = arith.constant 3 : index
    %c0_13 = arith.constant 0 : index
    %c0_14 = arith.constant 0 : index
    %25 = vector.load %arg3[%c3, %c0_13, %c0_14] : memref<9x16x16xbf16, #tpu.memory_space<vmem>>, vector<1x16x16xbf16>
    %26 = vector.shape_cast %25 : vector<1x16x16xbf16> to vector<16x16xbf16>
    %cst_15 = arith.constant dense<0.000000e+00> : vector<80x16xf32>
    %27 = tpu.matmul %24, %26, %cst_15 {dimension_numbers = #tpu.dot_dimension_numbers<[1], [0], [0], [1], [0, 0, 1, 1], [], []>} : vector<80x16xbf16>, vector<16x16xbf16>, vector<80x16xf32> -> vector<80x16xf32>
    %28 = arith.addf %23, %27 : vector<80x16xf32>
    %29 = vector.extract_strided_slice %4 {offsets = [11, 0], sizes = [80, 16], strides = [1, 1]} : vector<102x16xbf16> to vector<80x16xbf16>
    %c4 = arith.constant 4 : index
    %c0_16 = arith.constant 0 : index
    %c0_17 = arith.constant 0 : index
    %30 = vector.load %arg3[%c4, %c0_16, %c0_17] : memref<9x16x16xbf16, #tpu.memory_space<vmem>>, vector<1x16x16xbf16>
    %31 = vector.shape_cast %30 : vector<1x16x16xbf16> to vector<16x16xbf16>
    %cst_18 = arith.constant dense<0.000000e+00> : vector<80x16xf32>
    %32 = tpu.matmul %29, %31, %cst_18 {dimension_numbers = #tpu.dot_dimension_numbers<[1], [0], [0], [1], [0, 0, 1, 1], [], []>} : vector<80x16xbf16>, vector<16x16xbf16>, vector<80x16xf32> -> vector<80x16xf32>
    %33 = arith.addf %28, %32 : vector<80x16xf32>
    %34 = vector.extract_strided_slice %4 {offsets = [12, 0], sizes = [80, 16], strides = [1, 1]} : vector<102x16xbf16> to vector<80x16xbf16>
    %c5 = arith.constant 5 : index
    %c0_19 = arith.constant 0 : index
    %c0_20 = arith.constant 0 : index
    %35 = vector.load %arg3[%c5, %c0_19, %c0_20] : memref<9x16x16xbf16, #tpu.memory_space<vmem>>, vector<1x16x16xbf16>
    %36 = vector.shape_cast %35 : vector<1x16x16xbf16> to vector<16x16xbf16>
    %cst_21 = arith.constant dense<0.000000e+00> : vector<80x16xf32>
    %37 = tpu.matmul %34, %36, %cst_21 {dimension_numbers = #tpu.dot_dimension_numbers<[1], [0], [0], [1], [0, 0, 1, 1], [], []>} : vector<80x16xbf16>, vector<16x16xbf16>, vector<80x16xf32> -> vector<80x16xf32>
    %38 = arith.addf %33, %37 : vector<80x16xf32>
    %39 = vector.extract_strided_slice %4 {offsets = [20, 0], sizes = [80, 16], strides = [1, 1]} : vector<102x16xbf16> to vector<80x16xbf16>
    %c6 = arith.constant 6 : index
    %c0_22 = arith.constant 0 : index
    %c0_23 = arith.constant 0 : index
    %40 = vector.load %arg3[%c6, %c0_22, %c0_23] : memref<9x16x16xbf16, #tpu.memory_space<vmem>>, vector<1x16x16xbf16>
    %41 = vector.shape_cast %40 : vector<1x16x16xbf16> to vector<16x16xbf16>
    %cst_24 = arith.constant dense<0.000000e+00> : vector<80x16xf32>
    %42 = tpu.matmul %39, %41, %cst_24 {dimension_numbers = #tpu.dot_dimension_numbers<[1], [0], [0], [1], [0, 0, 1, 1], [], []>} : vector<80x16xbf16>, vector<16x16xbf16>, vector<80x16xf32> -> vector<80x16xf32>
    %43 = arith.addf %38, %42 : vector<80x16xf32>
    %44 = vector.extract_strided_slice %4 {offsets = [21, 0], sizes = [80, 16], strides = [1, 1]} : vector<102x16xbf16> to vector<80x16xbf16>
    %c7 = arith.constant 7 : index
    %c0_25 = arith.constant 0 : index
    %c0_26 = arith.constant 0 : index
    %45 = vector.load %arg3[%c7, %c0_25, %c0_26] : memref<9x16x16xbf16, #tpu.memory_space<vmem>>, vector<1x16x16xbf16>
    %46 = vector.shape_cast %45 : vector<1x16x16xbf16> to vector<16x16xbf16>
    %cst_27 = arith.constant dense<0.000000e+00> : vector<80x16xf32>
    %47 = tpu.matmul %44, %46, %cst_27 {dimension_numbers = #tpu.dot_dimension_numbers<[1], [0], [0], [1], [0, 0, 1, 1], [], []>} : vector<80x16xbf16>, vector<16x16xbf16>, vector<80x16xf32> -> vector<80x16xf32>
    %48 = arith.addf %43, %47 : vector<80x16xf32>
    %49 = vector.extract_strided_slice %4 {offsets = [22, 0], sizes = [80, 16], strides = [1, 1]} : vector<102x16xbf16> to vector<80x16xbf16>
    %c8 = arith.constant 8 : index
    %c0_28 = arith.constant 0 : index
    %c0_29 = arith.constant 0 : index
    %50 = vector.load %arg3[%c8, %c0_28, %c0_29] : memref<9x16x16xbf16, #tpu.memory_space<vmem>>, vector<1x16x16xbf16>
    %51 = vector.shape_cast %50 : vector<1x16x16xbf16> to vector<16x16xbf16>
    %cst_30 = arith.constant dense<0.000000e+00> : vector<80x16xf32>
    %52 = tpu.matmul %49, %51, %cst_30 {dimension_numbers = #tpu.dot_dimension_numbers<[1], [0], [0], [1], [0, 0, 1, 1], [], []>} : vector<80x16xbf16>, vector<16x16xbf16>, vector<80x16xf32> -> vector<80x16xf32>
    %53 = arith.addf %48, %52 : vector<80x16xf32>
    %54 = arith.truncf %53 : vector<80x16xf32> to vector<80x16xbf16>
    %c0_31 = arith.constant 0 : index
    %c0_32 = arith.constant 0 : index
    %c0_33 = arith.constant 0 : index
    %55 = vector.load %arg4[%c0_31, %c0_32, %c0_33] : memref<1x80x16xbf16, #tpu.memory_space<vmem>>, vector<1x80x16xbf16>
    %56 = vector.shape_cast %55 : vector<1x80x16xbf16> to vector<80x16xbf16>
    %57 = vector.shape_cast %54 : vector<80x16xbf16> to vector<1x80x16xbf16>
    tpu.vector_store %arg4[%c0_31, %c0_32, %c0_33], %57 {strides = array<i32>} : memref<1x80x16xbf16, #tpu.memory_space<vmem>>, vector<1x80x16xbf16>,
    return
  }
  func.func @transform_0(%arg0: i32) -> i32 {
    %c0_i32 = arith.constant 0 : i32
    %c0_i32_0 = arith.constant 0 : i32
    return %c0_i32 : i32
  }
  func.func @transform_1(%arg0: i32) -> (i32, i32, i32) {
    %c0_i32 = arith.constant 0 : i32
    %c0_i32_0 = arith.constant 0 : i32
    %c0_i32_1 = arith.constant 0 : i32
    return %arg0, %c0_i32, %c0_i32_0 : i32, i32, i32
  }
  func.func @transform_2(%arg0: i32) -> (i32, i32, i32) {
    %c0_i32 = arith.constant 0 : i32
    %c0_i32_0 = arith.constant 0 : i32
    %c0_i32_1 = arith.constant 0 : i32
    %c0_i32_2 = arith.constant 0 : i32
    return %c0_i32, %c0_i32_0, %c0_i32_1 : i32, i32, i32
  }
  func.func @transform_3(%arg0: i32) -> (i32, i32, i32) {
    %c0_i32 = arith.constant 0 : i32
    %c0_i32_0 = arith.constant 0 : i32
    %c0_i32_1 = arith.constant 0 : i32
    return %arg0, %c0_i32, %c0_i32_0 : i32, i32, i32
  }
}

module attributes {stable_mosaic.version = 11 : i64} {
  func.func @_mixed_step_kernel(%arg0: i32, %arg1: memref<1xf32, #tpu.memory_space<smem>>, %arg2: memref<1x38x64xbf16, #tpu.memory_space<vmem>>, %arg3: memref<9x64x64xbf16, #tpu.memory_space<vmem>>, %arg4: memref<1x24x64xbf16, #tpu.memory_space<vmem>>) attributes {dimension_semantics = [#tpu.dimension_semantics<parallel>], iteration_bounds = array<i64: 2>, scalar_prefetch = 0 : i64, scratch_operands = 0 : i64, tpu.core_type = #tpu.core_type<tc>, window_params = [{transform_indices = @transform_0, window_bounds = array<i64: 1>}, {transform_indices = @transform_1, window_bounds = array<i64: 1, 38, 64>}, {pipeline_mode = #tpu.pipeline_mode<synchronous>, transform_indices = @transform_2, window_bounds = array<i64: 9, 64, 64>}, {transform_indices = @transform_3, window_bounds = array<i64: 1, 24, 64>}]} {
    %c0 = arith.constant 0 : index
    %0 = memref.load %arg1[%c0] : memref<1xf32, #tpu.memory_space<smem>>
    %c0_0 = arith.constant 0 : index
    %c0_1 = arith.constant 0 : index
    %c0_2 = arith.constant 0 : index
    %1 = vector.load %arg2[%c0_0, %c0_1, %c0_2] : memref<1x38x64xbf16, #tpu.memory_space<vmem>>, vector<1x38x64xbf16>
    %2 = vector.shape_cast %1 : vector<1x38x64xbf16> to vector<38x64xbf16>
    %cst = arith.constant 0.000000e+00 : bf16
    %3 = vector.broadcast %cst : bf16 to vector<38x64xbf16>
    %4 = arith.maximumf %2, %3 : vector<38x64xbf16>
    %5 = vector.extract_strided_slice %2 {offsets = [7, 0], sizes = [24, 64], strides = [1, 1]} : vector<38x64xbf16> to vector<24x64xbf16>
    %6 = arith.extf %5 : vector<24x64xbf16> to vector<24x64xf32>
    %7 = vector.broadcast %0 : f32 to vector<24x64xf32>
    %8 = arith.mulf %7, %6 : vector<24x64xf32>
    %9 = vector.extract_strided_slice %4 {offsets = [0, 0], sizes = [24, 64], strides = [1, 1]} : vector<38x64xbf16> to vector<24x64xbf16>
    %c0_3 = arith.constant 0 : index
    %c0_4 = arith.constant 0 : index
    %c0_5 = arith.constant 0 : index
    %10 = vector.load %arg3[%c0_3, %c0_4, %c0_5] : memref<9x64x64xbf16, #tpu.memory_space<vmem>>, vector<1x64x64xbf16>
    %11 = vector.shape_cast %10 : vector<1x64x64xbf16> to vector<64x64xbf16>
    %cst_6 = arith.constant dense<0.000000e+00> : vector<24x64xf32>
    %12 = tpu.matmul %9, %11, %cst_6 {dimension_numbers = #tpu.dot_dimension_numbers<[1], [0], [0], [1], [0, 0, 1, 1], [], []>} : vector<24x64xbf16>, vector<64x64xbf16>, vector<24x64xf32> -> vector<24x64xf32>
    %13 = arith.addf %8, %12 : vector<24x64xf32>
    %14 = vector.extract_strided_slice %4 {offsets = [1, 0], sizes = [24, 64], strides = [1, 1]} : vector<38x64xbf16> to vector<24x64xbf16>
    %c1 = arith.constant 1 : index
    %c0_7 = arith.constant 0 : index
    %c0_8 = arith.constant 0 : index
    %15 = vector.load %arg3[%c1, %c0_7, %c0_8] : memref<9x64x64xbf16, #tpu.memory_space<vmem>>, vector<1x64x64xbf16>
    %16 = vector.shape_cast %15 : vector<1x64x64xbf16> to vector<64x64xbf16>
    %cst_9 = arith.constant dense<0.000000e+00> : vector<24x64xf32>
    %17 = tpu.matmul %14, %16, %cst_9 {dimension_numbers = #tpu.dot_dimension_numbers<[1], [0], [0], [1], [0, 0, 1, 1], [], []>} : vector<24x64xbf16>, vector<64x64xbf16>, vector<24x64xf32> -> vector<24x64xf32>
    %18 = arith.addf %13, %17 : vector<24x64xf32>
    %19 = vector.extract_strided_slice %4 {offsets = [2, 0], sizes = [24, 64], strides = [1, 1]} : vector<38x64xbf16> to vector<24x64xbf16>
    %c2 = arith.constant 2 : index
    %c0_10 = arith.constant 0 : index
    %c0_11 = arith.constant 0 : index
    %20 = vector.load %arg3[%c2, %c0_10, %c0_11] : memref<9x64x64xbf16, #tpu.memory_space<vmem>>, vector<1x64x64xbf16>
    %21 = vector.shape_cast %20 : vector<1x64x64xbf16> to vector<64x64xbf16>
    %cst_12 = arith.constant dense<0.000000e+00> : vector<24x64xf32>
    %22 = tpu.matmul %19, %21, %cst_12 {dimension_numbers = #tpu.dot_dimension_numbers<[1], [0], [0], [1], [0, 0, 1, 1], [], []>} : vector<24x64xbf16>, vector<64x64xbf16>, vector<24x64xf32> -> vector<24x64xf32>
    %23 = arith.addf %18, %22 : vector<24x64xf32>
    %24 = vector.extract_strided_slice %4 {offsets = [6, 0], sizes = [24, 64], strides = [1, 1]} : vector<38x64xbf16> to vector<24x64xbf16>
    %c3 = arith.constant 3 : index
    %c0_13 = arith.constant 0 : index
    %c0_14 = arith.constant 0 : index
    %25 = vector.load %arg3[%c3, %c0_13, %c0_14] : memref<9x64x64xbf16, #tpu.memory_space<vmem>>, vector<1x64x64xbf16>
    %26 = vector.shape_cast %25 : vector<1x64x64xbf16> to vector<64x64xbf16>
    %cst_15 = arith.constant dense<0.000000e+00> : vector<24x64xf32>
    %27 = tpu.matmul %24, %26, %cst_15 {dimension_numbers = #tpu.dot_dimension_numbers<[1], [0], [0], [1], [0, 0, 1, 1], [], []>} : vector<24x64xbf16>, vector<64x64xbf16>, vector<24x64xf32> -> vector<24x64xf32>
    %28 = arith.addf %23, %27 : vector<24x64xf32>
    %29 = vector.extract_strided_slice %4 {offsets = [7, 0], sizes = [24, 64], strides = [1, 1]} : vector<38x64xbf16> to vector<24x64xbf16>
    %c4 = arith.constant 4 : index
    %c0_16 = arith.constant 0 : index
    %c0_17 = arith.constant 0 : index
    %30 = vector.load %arg3[%c4, %c0_16, %c0_17] : memref<9x64x64xbf16, #tpu.memory_space<vmem>>, vector<1x64x64xbf16>
    %31 = vector.shape_cast %30 : vector<1x64x64xbf16> to vector<64x64xbf16>
    %cst_18 = arith.constant dense<0.000000e+00> : vector<24x64xf32>
    %32 = tpu.matmul %29, %31, %cst_18 {dimension_numbers = #tpu.dot_dimension_numbers<[1], [0], [0], [1], [0, 0, 1, 1], [], []>} : vector<24x64xbf16>, vector<64x64xbf16>, vector<24x64xf32> -> vector<24x64xf32>
    %33 = arith.addf %28, %32 : vector<24x64xf32>
    %34 = vector.extract_strided_slice %4 {offsets = [8, 0], sizes = [24, 64], strides = [1, 1]} : vector<38x64xbf16> to vector<24x64xbf16>
    %c5 = arith.constant 5 : index
    %c0_19 = arith.constant 0 : index
    %c0_20 = arith.constant 0 : index
    %35 = vector.load %arg3[%c5, %c0_19, %c0_20] : memref<9x64x64xbf16, #tpu.memory_space<vmem>>, vector<1x64x64xbf16>
    %36 = vector.shape_cast %35 : vector<1x64x64xbf16> to vector<64x64xbf16>
    %cst_21 = arith.constant dense<0.000000e+00> : vector<24x64xf32>
    %37 = tpu.matmul %34, %36, %cst_21 {dimension_numbers = #tpu.dot_dimension_numbers<[1], [0], [0], [1], [0, 0, 1, 1], [], []>} : vector<24x64xbf16>, vector<64x64xbf16>, vector<24x64xf32> -> vector<24x64xf32>
    %38 = arith.addf %33, %37 : vector<24x64xf32>
    %39 = vector.extract_strided_slice %4 {offsets = [12, 0], sizes = [24, 64], strides = [1, 1]} : vector<38x64xbf16> to vector<24x64xbf16>
    %c6 = arith.constant 6 : index
    %c0_22 = arith.constant 0 : index
    %c0_23 = arith.constant 0 : index
    %40 = vector.load %arg3[%c6, %c0_22, %c0_23] : memref<9x64x64xbf16, #tpu.memory_space<vmem>>, vector<1x64x64xbf16>
    %41 = vector.shape_cast %40 : vector<1x64x64xbf16> to vector<64x64xbf16>
    %cst_24 = arith.constant dense<0.000000e+00> : vector<24x64xf32>
    %42 = tpu.matmul %39, %41, %cst_24 {dimension_numbers = #tpu.dot_dimension_numbers<[1], [0], [0], [1], [0, 0, 1, 1], [], []>} : vector<24x64xbf16>, vector<64x64xbf16>, vector<24x64xf32> -> vector<24x64xf32>
    %43 = arith.addf %38, %42 : vector<24x64xf32>
    %44 = vector.extract_strided_slice %4 {offsets = [13, 0], sizes = [24, 64], strides = [1, 1]} : vector<38x64xbf16> to vector<24x64xbf16>
    %c7 = arith.constant 7 : index
    %c0_25 = arith.constant 0 : index
    %c0_26 = arith.constant 0 : index
    %45 = vector.load %arg3[%c7, %c0_25, %c0_26] : memref<9x64x64xbf16, #tpu.memory_space<vmem>>, vector<1x64x64xbf16>
    %46 = vector.shape_cast %45 : vector<1x64x64xbf16> to vector<64x64xbf16>
    %cst_27 = arith.constant dense<0.000000e+00> : vector<24x64xf32>
    %47 = tpu.matmul %44, %46, %cst_27 {dimension_numbers = #tpu.dot_dimension_numbers<[1], [0], [0], [1], [0, 0, 1, 1], [], []>} : vector<24x64xbf16>, vector<64x64xbf16>, vector<24x64xf32> -> vector<24x64xf32>
    %48 = arith.addf %43, %47 : vector<24x64xf32>
    %49 = vector.extract_strided_slice %4 {offsets = [14, 0], sizes = [24, 64], strides = [1, 1]} : vector<38x64xbf16> to vector<24x64xbf16>
    %c8 = arith.constant 8 : index
    %c0_28 = arith.constant 0 : index
    %c0_29 = arith.constant 0 : index
    %50 = vector.load %arg3[%c8, %c0_28, %c0_29] : memref<9x64x64xbf16, #tpu.memory_space<vmem>>, vector<1x64x64xbf16>
    %51 = vector.shape_cast %50 : vector<1x64x64xbf16> to vector<64x64xbf16>
    %cst_30 = arith.constant dense<0.000000e+00> : vector<24x64xf32>
    %52 = tpu.matmul %49, %51, %cst_30 {dimension_numbers = #tpu.dot_dimension_numbers<[1], [0], [0], [1], [0, 0, 1, 1], [], []>} : vector<24x64xbf16>, vector<64x64xbf16>, vector<24x64xf32> -> vector<24x64xf32>
    %53 = arith.addf %48, %52 : vector<24x64xf32>
    %54 = arith.truncf %53 : vector<24x64xf32> to vector<24x64xbf16>
    %c0_31 = arith.constant 0 : index
    %c0_32 = arith.constant 0 : index
    %c0_33 = arith.constant 0 : index
    %55 = vector.load %arg4[%c0_31, %c0_32, %c0_33] : memref<1x24x64xbf16, #tpu.memory_space<vmem>>, vector<1x24x64xbf16>
    %56 = vector.shape_cast %55 : vector<1x24x64xbf16> to vector<24x64xbf16>
    %57 = vector.shape_cast %54 : vector<24x64xbf16> to vector<1x24x64xbf16>
    tpu.vector_store %arg4[%c0_31, %c0_32, %c0_33], %57 {strides = array<i32>} : memref<1x24x64xbf16, #tpu.memory_space<vmem>>, vector<1x24x64xbf16>,
    return
  }
  func.func @transform_0(%arg0: i32) -> i32 {
    %c0_i32 = arith.constant 0 : i32
    %c0_i32_0 = arith.constant 0 : i32
    return %c0_i32 : i32
  }
  func.func @transform_1(%arg0: i32) -> (i32, i32, i32) {
    %c0_i32 = arith.constant 0 : i32
    %c0_i32_0 = arith.constant 0 : i32
    %c0_i32_1 = arith.constant 0 : i32
    return %arg0, %c0_i32, %c0_i32_0 : i32, i32, i32
  }
  func.func @transform_2(%arg0: i32) -> (i32, i32, i32) {
    %c0_i32 = arith.constant 0 : i32
    %c0_i32_0 = arith.constant 0 : i32
    %c0_i32_1 = arith.constant 0 : i32
    %c0_i32_2 = arith.constant 0 : i32
    return %c0_i32, %c0_i32_0, %c0_i32_1 : i32, i32, i32
  }
  func.func @transform_3(%arg0: i32) -> (i32, i32, i32) {
    %c0_i32 = arith.constant 0 : i32
    %c0_i32_0 = arith.constant 0 : i32
    %c0_i32_1 = arith.constant 0 : i32
    return %arg0, %c0_i32, %c0_i32_0 : i32, i32, i32
  }
}

</mosaic_0001>

<llo_original>
// kernel: cell_forward.2
$region0: #{cell_forward.2}
  #allocation0 [shape = 'u32[]', space=smem, size = 0x4, offset = 0x4, fixed_abs, tag = 'smem constant byte address 0x4 - core index']
  #allocation1 [shape = 'u32[72,128]{1,0:T(1,128)}', space=vmem, size = 0x9000, scoped, tag = 'internal scratch']
  #allocation2 [shape = 'f32[1]{0:T(128)S(6)}', space=smem, size = 0x200, scoped, tag = 'scoped memory for cell_forward.2']
  %s0 = inlined_call_operand.<no memory space> [shape: f32[1], index: 0, kind: input, shape index: {}]
  %s1 = inlined_call_operand.vmem [shape: bf16[2,102,16], index: 1, kind: input, shape index: {}]
  %s2 = inlined_call_operand.vmem [shape: bf16[9,16,16], index: 2, kind: input, shape index: {}]
  %s3 = inlined_call_operand.vmem [shape: bf16[2,80,16], index: 3, kind: output, shape index: {}]
  %s4 = sld [smem:[#allocation0]]
  $region45: #{cell_forward.2} parent=0
    _
  %s6 = ssub.s32 1, %s4
  %s7 = scalar_select 0, %s6, %s4
  %8 = sst [smem:[#allocation2]] %s0
  loop: start=0, step=1, limit=4
  $region2: #{cell_forward.2} parent=0 // loop_pre_header
    _
  $region3: #{cell_forward.2} parent=0 // loop_header
    %s10 = sphi 0, %s14
    %p11 = scmp.ge.s32.totalorder %s10, 4
    %s18 = sphi 0, %s18
    %s20 = sphi 0, %s18
    %s21 = sphi 0, %s20
    %s35 = sphi 0, %s21
    %s41 = sphi 0, %s43
    %s44 = sphi 0, %s41
    %s45 = sphi 0, %s44
    %s61 = sphi 0, %s45
    %s65 = sphi 0, %s65
    %s67 = sphi 0, %s65
    %s68 = sphi 0, %s67
    %s82 = sphi 0, %s68
    %s88 = sphi 0, %s90
    %s91 = sphi 0, %s88
    %s92 = sphi 0, %s91
    %s108 = sphi 0, %s92
  $region4: #{cell_forward.2} parent=0 // loop_header_branch
    %13 = sbr.rel (%p11) target = $region8
  $region5: #{cell_forward.2} parent=0 // loop_body
    %s15 = ssub.s32 %s10, 1
    %s16 = ssub.s32 %s10, 2
    %s17 = sadd.s32 %s10, 1
    %s19 = sadd.s32 %s18, 1
    %p22 = scmp.eq.s32.totalorder %s10, 1
    %p23 = scmp.ne.s32.totalorder %s18, %s20
    %p24 = scmp.eq.s32.totalorder %s10, 0
    %p25 = por %p23, %p24
    %p26 = scmp.ne.s32.totalorder %s18, %s20
    %p27 = scmp.eq.s32.totalorder %s15, 1
    %p28 = por %p26, %p27
    %p29 = scmp.ne.s32.totalorder %s20, %s21
    %p30 = scmp.eq.s32.totalorder %s15, 0
    %p31 = por %p29, %p30
    %p32 = scmp.ne.s32.totalorder %s20, %s21
    %p33 = scmp.eq.s32.totalorder %s16, 1
    %p34 = por %p32, %p33
    %p36 = scmp.ne.s32.totalorder %s21, %s35
    %p37 = scmp.eq.s32.totalorder %s16, 0
    %p38 = por %p36, %p37
    %s39 = ssub.s32 %s10, %s17
    %p40 = scmp.eq.s32.totalorder %s39, 0
    %s42 = sadd.s32 %s41, 1
    %s43 = scalar_select %p40, %s41, %s42
    %p46 = pneg %p40
    %p47 = scmp.eq.s32.totalorder %s10, 1
    %p48 = por %p46, %p47
    %p49 = scmp.ne.s32.totalorder %s41, %s44
    %p50 = scmp.eq.s32.totalorder %s10, 0
    %p51 = por %p49, %p50
    %p52 = scmp.ne.s32.totalorder %s41, %s44
    %p53 = scmp.eq.s32.totalorder %s15, 1
    %p54 = por %p52, %p53
    %p55 = scmp.ne.s32.totalorder %s44, %s45
    %p56 = scmp.eq.s32.totalorder %s15, 0
    %p57 = por %p55, %p56
    %p58 = scmp.ne.s32.totalorder %s44, %s45
    %p59 = scmp.eq.s32.totalorder %s16, 1
    %p60 = por %p58, %p59
    %p62 = scmp.ne.s32.totalorder %s45, %s61
    %p63 = scmp.eq.s32.totalorder %s16, 0
    %p64 = por %p62, %p63
    %s66 = sadd.s32 %s65, 1
    %p69 = scmp.eq.s32.totalorder %s10, 1
    %p70 = scmp.ne.s32.totalorder %s65, %s67
    %p71 = scmp.eq.s32.totalorder %s10, 0
    %p72 = por %p70, %p71
    %p73 = scmp.ne.s32.totalorder %s65, %s67
    %p74 = scmp.eq.s32.totalorder %s15, 1
    %p75 = por %p73, %p74
    %p76 = scmp.ne.s32.totalorder %s67, %s68
    %p77 = scmp.eq.s32.totalorder %s15, 0
    %p78 = por %p76, %p77
    %p79 = scmp.ne.s32.totalorder %s67, %s68
    %p80 = scmp.eq.s32.totalorder %s16, 1
    %p81 = por %p79, %p80
    %p83 = scmp.ne.s32.totalorder %s68, %s82
    %p84 = scmp.eq.s32.totalorder %s16, 0
    %p85 = por %p83, %p84
    %s86 = ssub.s32 %s10, %s17
    %p87 = scmp.eq.s32.totalorder %s86, 0
    %s89 = sadd.s32 %s88, 1
    %s90 = scalar_select %p87, %s88, %s89
    %p93 = pneg %p87
    %p94 = scmp.eq.s32.totalorder %s10, 1
    %p95 = por %p93, %p94
    %p96 = scmp.ne.s32.totalorder %s88, %s91
    %p97 = scmp.eq.s32.totalorder %s10, 0
    %p98 = por %p96, %p97
    %p99 = scmp.ne.s32.totalorder %s88, %s91
    %p100 = scmp.eq.s32.totalorder %s15, 1
    %p101 = por %p99, %p100
    %p102 = scmp.ne.s32.totalorder %s91, %s92
    %p103 = scmp.eq.s32.totalorder %s15, 0
    %p104 = por %p102, %p103
    %p105 = scmp.ne.s32.totalorder %s91, %s92
    %p106 = scmp.eq.s32.totalorder %s16, 1
    %p107 = por %p105, %p106
    %p109 = scmp.ne.s32.totalorder %s92, %s108
    %p110 = scmp.eq.s32.totalorder %s16, 0
    %p111 = por %p109, %p110
    %p112 = scmp.le.s32.totalorder 1, %s10
    %p113 = scmp.lt.s32.totalorder %s10, 3
    %p114 = pnand %p112, %p113
    %p115 = pneg %p114
    // Predicated region
    $region9: #{cell_forward.2} parent=5 // pred_check
      _
    $region10: #{cell_forward.2} parent=5 // pred_check_branch
      %117 = sbr.rel (%p114) target = $region12
    $region11: #{cell_forward.2} parent=5 // pred_region
      %s118 = ssub.s32 %s10, 1
      // Predicated region
      $region13: #{cell_forward.2} parent=11 // pred_check
        %p119 = pneg %p31
      $region14: #{cell_forward.2} parent=11 // pred_check_branch
        %121 = sbr.rel (%p119) target = $region16
      $region15: #{cell_forward.2} parent=11 // pred_region
        _
      $region16: #{cell_forward.2} parent=11 // pred_fallthru
        _
      // Predicated region
      $region17: #{cell_forward.2} parent=11 // pred_check
        %p122 = pneg %p78
      $region18: #{cell_forward.2} parent=11 // pred_check_branch
        %124 = sbr.rel (%p122) target = $region20
      $region19: #{cell_forward.2} parent=11 // pred_region
        _
      $region20: #{cell_forward.2} parent=11 // pred_fallthru
        _
    $region12: #{cell_forward.2} parent=5 // pred_fallthru
      _
    %p125 = scmp.lt.s32.totalorder %s10, 2
    // Predicated region
    $region21: #{cell_forward.2} parent=5 // pred_check
      %p126 = pneg %p125
    $region22: #{cell_forward.2} parent=5 // pred_check_branch
      %128 = sbr.rel (%p126) target = $region24
    $region23: #{cell_forward.2} parent=5 // pred_region
      // Predicated region
      $region25: #{cell_forward.2} parent=23 // pred_check
        %p129 = pneg %p51
      $region26: #{cell_forward.2} parent=23 // pred_check_branch
        %131 = sbr.rel (%p129) target = $region28
      $region27: #{cell_forward.2} parent=23 // pred_region
        %p132 = scmp.lt.s32.totalorder %s10, 1
        %s133 = scalar_select %p132, %s10, 1
        %s134 = smul.addr %s133, 13
        %s135 = smul.addr %s134, 4
        %s136 = scalar_lea.vmem %s1, %s135
      $region28: #{cell_forward.2} parent=23 // pred_fallthru
        _
    $region24: #{cell_forward.2} parent=5 // pred_fallthru
      _
    %p137 = scmp.le.s32.totalorder 1, %s10
    %p138 = scmp.lt.s32.totalorder %s10, 3
    %p139 = pnand %p137, %p138
    %p140 = pneg %p139
    // Predicated region
    $region29: #{cell_forward.2} parent=5 // pred_check
      _
    $region30: #{cell_forward.2} parent=5 // pred_check_branch
      %142 = sbr.rel (%p139) target = $region32
    $region31: #{cell_forward.2} parent=5 // pred_region
      %s143 = ssub.s32 %s10, 1
      %p144 = pneg %p31
      %p145 = pneg %p28
      %p146 = scmp.lt.s32.totalorder %s15, 1
      %s147 = scalar_select %p146, %s15, 1
      %s148 = smul.addr %s147, 13
      %s149 = smul.addr %s148, 4
      %s150 = scalar_lea.vmem %s1, %s149
      %p151 = pneg %p57
      %p152 = pneg %p54
      %p153 = pneg %p78
      %p154 = pneg %p75
      %p155 = pneg %p104
      %p156 = pneg %p101
      %p157 = scmp.lt.s32.totalorder %s15, 1
      %s158 = scalar_select %p157, %s15, 1
      %s159 = smul.addr %s158, 10
      %s160 = smul.addr %s159, 4
      %s161 = scalar_lea.vmem %s3, %s160
      %p162 = scmp.lt.s32.totalorder %s15, 1
      %s163 = scalar_select %p162, %s15, 1
      %s164 = smul.addr %s163, 13
      %s165 = smul.addr %s164, 4
      %s166 = scalar_lea.vmem %s1, %s165
      %p167 = scmp.lt.s32.totalorder %s15, 1
      %s168 = scalar_select %p167, %s15, 1
      %s169 = smul.addr %s168, 10
      %s170 = smul.addr %s169, 4
      %s171 = scalar_lea.vmem %s3, %s170
      %s173 = sld [smem:[#allocation2]]
      %v174 = vld [vmem:[%s166] sm:$0xf]
      %v175 = vld [vmem:[%s166 + $0x4] sm:$0xf]
      %v176 = vld [vmem:[%s166 + $0x8] sm:$0xf]
      %v177 = vld [vmem:[%s166 + $0xc] sm:$0xf]
      %v178 = vld [vmem:[%s166 + $0x10] sm:$0xf]
      %v179 = vld [vmem:[%s166 + $0x14] sm:$0xf]
      %v180 = vld [vmem:[%s166 + $0x18] sm:$0xf]
      %v181 = vld [vmem:[%s166 + $0x1c] sm:$0xf]
      %v182 = vld [vmem:[%s166 + $0x20] sm:$0xf]
      %v183 = vld [vmem:[%s166 + $0x24] sm:$0xf]
      %v184 = vld [vmem:[%s166 + $0x28] sm:$0xf]
      %v185 = vld [vmem:[%s166 + $0x2c] sm:$0xf]
      %v186 = vld [vmem:[%s166 + $0x30] sm:$0x7]
      %v187 = vunpack.c.l.bf16 %v174
      %v188 = vunpack.c.l.bf16 %v175
      %v189 = vunpack.c.l.bf16 %v176
      %v190 = vunpack.c.l.bf16 %v177
      %v191 = vunpack.c.l.bf16 %v178
      %v192 = vunpack.c.l.bf16 %v179
      %v193 = vunpack.c.l.bf16 %v180
      %v194 = vunpack.c.l.bf16 %v181
      %v195 = vunpack.c.l.bf16 %v182
      %v196 = vunpack.c.l.bf16 %v183
      %v197 = vunpack.c.l.bf16 %v184
      %v198 = vunpack.c.l.bf16 %v185
      %v199 = vunpack.c.l.bf16 %v186
      %v200 = vmax.f32 %v187, 0.0
      %v201 = vmax.f32 %v188, 0.0
      %v202 = vmax.f32 %v189, 0.0
      %v203 = vmax.f32 %v190, 0.0
      %v204 = vmax.f32 %v191, 0.0
      %v205 = vmax.f32 %v192, 0.0
      %v206 = vmax.f32 %v193, 0.0
      %v207 = vmax.f32 %v194, 0.0
      %v208 = vmax.f32 %v195, 0.0
      %v209 = vmax.f32 %v196, 0.0
      %v210 = vmax.f32 %v197, 0.0
      %v211 = vmax.f32 %v198, 0.0
      %v212 = vmax.f32 %v199, 0.0
      %v213 = vpack.c.bf16 %v200, %v200
      %v214 = vpack.c.bf16 %v201, %v201
      %v215 = vpack.c.bf16 %v202, %v202
      %v216 = vpack.c.bf16 %v203, %v203
      %v217 = vpack.c.bf16 %v204, %v204
      %v218 = vpack.c.bf16 %v205, %v205
      %v219 = vpack.c.bf16 %v206, %v206
      %v220 = vpack.c.bf16 %v207, %v207
      %v221 = vpack.c.bf16 %v208, %v208
      %v222 = vpack.c.bf16 %v209, %v209
      %v223 = vpack.c.bf16 %v210, %v210
      %v224 = vpack.c.bf16 %v211, %v211
      %v225 = vpack.c.bf16 %v212, %v212
      %v226 = vstv %s173
      %v227 = vmul.f32 %v226, %v188
      %v228 = vmul.f32 %v226, %v189
      %v229 = vmul.f32 %v226, %v190
      %v230 = vmul.f32 %v226, %v191
      %v231 = vmul.f32 %v226, %v192
      %v232 = vmul.f32 %v226, %v193
      %v233 = vmul.f32 %v226, %v194
      %v234 = vmul.f32 %v226, %v195
      %v235 = vmul.f32 %v226, %v196
      %v236 = vmul.f32 %v226, %v197
      %v237 = vmul.f32 %v226, %v198
      %v238 = vld [vmem:[%s2] sm:$0xf]
      %v239 = vld [vmem:[%s2 + $0x4] sm:$0xf]
      %v250 = vunpack.c.l.b16 %v213
      %v251 = vunpack.c.l.b16 %v214
      %v252 = vunpack.c.l.b16 %v215
      %v253 = vunpack.c.l.b16 %v216
      %v254 = vunpack.c.l.b16 %v217
      %v255 = vunpack.c.l.b16 %v218
      %v256 = vunpack.c.l.b16 %v219
      %v257 = vunpack.c.l.b16 %v220
      %v258 = vunpack.c.l.b16 %v221
      %v259 = vunpack.c.l.b16 %v222
      %v260 = vpack.c.b16 %v251, %v250
      %v261 = vpack.c.b16 %v253, %v252
      %v262 = vpack.c.b16 %v255, %v254
      %v263 = vpack.c.b16 %v257, %v256
      %v264 = vpack.c.b16 %v259, %v258
      %v267 = vunpack.c.l.b16 %v238
      %v268 = vunpack.c.l.b16 %v239
      %v269 = vpack.c.b16 %v268, %v267
      %vm271 = vcmask 130048
      %v273 = vsel %vm271, %v260, 0
      %v276 = vsel %vm271, %v261, 0
      %v279 = vsel %vm271, %v262, 0
      %v282 = vsel %vm271, %v263, 0
      %v285 = vsel %vm271, %v264, 0
      %287 = vmatpush.bf16.msra.mxu0 0
      %288 = vmatpush.bf16.msra.mxu0 0
      %289 = vmatpush.bf16.msra.mxu0 0
      %290 = vmatpush.bf16.msra.mxu0 0
      %291 = vmatpush.bf16.msra.mxu0 0
      %292 = vmatpush.bf16.msra.mxu0 0
      %293 = vmatpush.bf16.msra.mxu0 0
      %294 = vmatpush.bf16.msra.mxu0 %v269
      %295 = vmatmul.bf16.gmra.mxu0 %v273
      %v296 = vpop.f32.mrf.mxu0
      %v297 = vadd.f32 0.0, %v296
      %v298 = vpop.f32.mrf.mxu0
      %v299 = vadd.f32 0.0, %v298
      %300 = vmatmul.bf16.gmra.mxu0 %v276
      %v301 = vpop.f32.mrf.mxu0
      %v302 = vadd.f32 0.0, %v301
      %v303 = vpop.f32.mrf.mxu0
      %v304 = vadd.f32 0.0, %v303
      %305 = vmatmul.bf16.gmra.mxu0 %v279
      %v306 = vpop.f32.mrf.mxu0
      %v307 = vadd.f32 0.0, %v306
      %v308 = vpop.f32.mrf.mxu0
      %v309 = vadd.f32 0.0, %v308
      %310 = vmatmul.bf16.gmra.mxu0 %v282
      %v311 = vpop.f32.mrf.mxu0
      %v312 = vadd.f32 0.0, %v311
      %v313 = vpop.f32.mrf.mxu0
      %v314 = vadd.f32 0.0, %v313
      %315 = vmatmul.bf16.gmra.mxu0 %v285
      %v316 = vpop.f32.mrf.mxu0
      %v317 = vadd.f32 0.0, %v316
      %v318 = vpop.f32.mrf.mxu0
      %v319 = vadd.f32 0.0, %v318
      %320 = vdwg.mxu0
      %vm331 = vcmask 1042432
      %v332 = vrot.slane %v297, 5
      %v333 = vrot.slane %v299, 5
      %v334 = vsel %vm331, %v332, %v333
      %v335 = vrot.slane %v302, 5
      %v336 = vsel %vm331, %v333, %v335
      %v337 = vrot.slane %v304, 5
      %v338 = vsel %vm331, %v335, %v337
      %v339 = vrot.slane %v307, 5
      %v340 = vsel %vm331, %v337, %v339
      %v341 = vrot.slane %v309, 5
      %v342 = vsel %vm331, %v339, %v341
      %v343 = vrot.slane %v312, 5
      %v344 = vsel %vm331, %v341, %v343
      %v345 = vrot.slane %v314, 5
      %v346 = vsel %vm331, %v343, %v345
      %v347 = vrot.slane %v317, 5
      %v348 = vsel %vm331, %v345, %v347
      %v349 = vrot.slane %v319, 5
      %v350 = vsel %vm331, %v347, %v349
      %v362 = vadd.f32 %v227, %v332
      %v363 = vadd.f32 %v228, %v334
      %v364 = vadd.f32 %v229, %v336
      %v365 = vadd.f32 %v230, %v338
      %v366 = vadd.f32 %v231, %v340
      %v367 = vadd.f32 %v232, %v342
      %v368 = vadd.f32 %v233, %v344
      %v369 = vadd.f32 %v234, %v346
      %v370 = vadd.f32 %v235, %v348
      %v371 = vadd.f32 %v236, %v350
      %v372 = vadd.f32 %v237, %v349
      %s373 = scalar_lea.vmem %s2, 8
      %v374 = vld [vmem:[%s373] sm:$0xf]
      %v375 = vld [vmem:[%s373 + $0x4] sm:$0xf]
      %v377 = vunpack.c.l.b16 %v223
      %v378 = vpack.c.b16 %v377, %v377
      %vm379 = vsmask.f32 7424
      %v380 = vshrl.u32 %v260, 16
      %v382 = vshll.u32 %v260, 16
      %v384 = vrot.slane %v382, 1
      %v385 = vor.u32 %v380, %v384
      %v386 = vshll.u32 %v261, 16
      %v388 = vrot.slane %v386, 1
      %v389 = vsel %vm379, %v385, %v388
      %v390 = vshrl.u32 %v261, 16
      %v392 = vor.u32 %v390, %v388
      %v393 = vshll.u32 %v262, 16
      %v395 = vrot.slane %v393, 1
      %v396 = vsel %vm379, %v392, %v395
      %v397 = vshrl.u32 %v262, 16
      %v399 = vor.u32 %v397, %v395
      %v400 = vshll.u32 %v263, 16
      %v402 = vrot.slane %v400, 1
      %v403 = vsel %vm379, %v399, %v402
      %v404 = vshrl.u32 %v263, 16
      %v406 = vor.u32 %v404, %v402
      %v407 = vshll.u32 %v264, 16
      %v409 = vrot.slane %v407, 1
      %v410 = vsel %vm379, %v406, %v409
      %v411 = vshrl.u32 %v264, 16
      %v413 = vor.u32 %v411, %v409
      %v415 = vshll.u32 %v378, 16
      %v417 = vrot.slane %v415, 1
      %v418 = vsel %vm379, %v413, %v417
      %v421 = vunpack.c.l.b16 %v374
      %v422 = vunpack.c.l.b16 %v375
      %v423 = vpack.c.b16 %v422, %v421
      %v426 = vsel %vm271, %v389, 0
      %v429 = vsel %vm271, %v396, 0
      %v432 = vsel %vm271, %v403, 0
      %v435 = vsel %vm271, %v410, 0
      %v438 = vsel %vm271, %v418, 0
      %440 = vmatpush.bf16.msra.mxu0 0
      %441 = vmatpush.bf16.msra.mxu0 0
      %442 = vmatpush.bf16.msra.mxu0 0
      %443 = vmatpush.bf16.msra.mxu0 0
      %444 = vmatpush.bf16.msra.mxu0 0
      %445 = vmatpush.bf16.msra.mxu0 0
      %446 = vmatpush.bf16.msra.mxu0 0
      %447 = vmatpush.bf16.msra.mxu0 %v423
      %448 = vmatmul.bf16.gmra.mxu0 %v426
      %v449 = vpop.f32.mrf.mxu0
      %v450 = vadd.f32 0.0, %v449
      %v451 = vpop.f32.mrf.mxu0
      %v452 = vadd.f32 0.0, %v451
      %453 = vmatmul.bf16.gmra.mxu0 %v429
      %v454 = vpop.f32.mrf.mxu0
      %v455 = vadd.f32 0.0, %v454
      %v456 = vpop.f32.mrf.mxu0
      %v457 = vadd.f32 0.0, %v456
      %458 = vmatmul.bf16.gmra.mxu0 %v432
      %v459 = vpop.f32.mrf.mxu0
      %v460 = vadd.f32 0.0, %v459
      %v461 = vpop.f32.mrf.mxu0
      %v462 = vadd.f32 0.0, %v461
      %463 = vmatmul.bf16.gmra.mxu0 %v435
      %v464 = vpop.f32.mrf.mxu0
      %v465 = vadd.f32 0.0, %v464
      %v466 = vpop.f32.mrf.mxu0
      %v467 = vadd.f32 0.0, %v466
      %468 = vmatmul.bf16.gmra.mxu0 %v438
      %v469 = vpop.f32.mrf.mxu0
      %v470 = vadd.f32 0.0, %v469
      %v471 = vpop.f32.mrf.mxu0
      %v472 = vadd.f32 0.0, %v471
      %473 = vdwg.mxu0
      %v484 = vrot.slane %v450, 5
      %v485 = vrot.slane %v452, 5
      %v486 = vsel %vm331, %v484, %v485
      %v487 = vrot.slane %v455, 5
      %v488 = vsel %vm331, %v485, %v487
      %v489 = vrot.slane %v457, 5
      %v490 = vsel %vm331, %v487, %v489
      %v491 = vrot.slane %v460, 5
      %v492 = vsel %vm331, %v489, %v491
      %v493 = vrot.slane %v462, 5
      %v494 = vsel %vm331, %v491, %v493
      %v495 = vrot.slane %v465, 5
      %v496 = vsel %vm331, %v493, %v495
      %v497 = vrot.slane %v467, 5
      %v498 = vsel %vm331, %v495, %v497
      %v499 = vrot.slane %v470, 5
      %v500 = vsel %vm331, %v497, %v499
      %v501 = vrot.slane %v472, 5
      %v502 = vsel %vm331, %v499, %v501
      %v514 = vadd.f32 %v362, %v484
      %v515 = vadd.f32 %v363, %v486
      %v516 = vadd.f32 %v364, %v488
      %v517 = vadd.f32 %v365, %v490
      %v518 = vadd.f32 %v366, %v492
      %v519 = vadd.f32 %v367, %v494
      %v520 = vadd.f32 %v368, %v496
      %v521 = vadd.f32 %v369, %v498
      %v522 = vadd.f32 %v370, %v500
      %v523 = vadd.f32 %v371, %v502
      %v524 = vadd.f32 %v372, %v501
      %s525 = scalar_lea.vmem %s2, 16
      %v526 = vld [vmem:[%s525] sm:$0xf]
      %v527 = vld [vmem:[%s525 + $0x4] sm:$0xf]
      %vm528 = vcmask 1046528
      %v529 = vrot.slane %v260, 1
      %v530 = vrot.slane %v261, 1
      %v531 = vsel %vm528, %v529, %v530
      %v532 = vrot.slane %v262, 1
      %v533 = vsel %vm528, %v530, %v532
      %v534 = vrot.slane %v263, 1
      %v535 = vsel %vm528, %v532, %v534
      %v536 = vrot.slane %v264, 1
      %v537 = vsel %vm528, %v534, %v536
      %v538 = vrot.slane %v378, 1
      %v539 = vsel %vm528, %v536, %v538
      %v542 = vunpack.c.l.b16 %v526
      %v543 = vunpack.c.l.b16 %v527
      %v544 = vpack.c.b16 %v543, %v542
      %v547 = vsel %vm271, %v531, 0
      %v550 = vsel %vm271, %v533, 0
      %v553 = vsel %vm271, %v535, 0
      %v556 = vsel %vm271, %v537, 0
      %v559 = vsel %vm271, %v539, 0
      %561 = vmatpush.bf16.msra.mxu0 0
      %562 = vmatpush.bf16.msra.mxu0 0
      %563 = vmatpush.bf16.msra.mxu0 0
      %564 = vmatpush.bf16.msra.mxu0 0
      %565 = vmatpush.bf16.msra.mxu0 0
      %566 = vmatpush.bf16.msra.mxu0 0
      %567 = vmatpush.bf16.msra.mxu0 0
      %568 = vmatpush.bf16.msra.mxu0 %v544
      %569 = vmatmul.bf16.gmra.mxu0 %v547
      %v570 = vpop.f32.mrf.mxu0
      %v571 = vadd.f32 0.0, %v570
      %v572 = vpop.f32.mrf.mxu0
      %v573 = vadd.f32 0.0, %v572
      %574 = vmatmul.bf16.gmra.mxu0 %v550
      %v575 = vpop.f32.mrf.mxu0
      %v576 = vadd.f32 0.0, %v575
      %v577 = vpop.f32.mrf.mxu0
      %v578 = vadd.f32 0.0, %v577
      %579 = vmatmul.bf16.gmra.mxu0 %v553
      %v580 = vpop.f32.mrf.mxu0
      %v581 = vadd.f32 0.0, %v580
      %v582 = vpop.f32.mrf.mxu0
      %v583 = vadd.f32 0.0, %v582
      %584 = vmatmul.bf16.gmra.mxu0 %v556
      %v585 = vpop.f32.mrf.mxu0
      %v586 = vadd.f32 0.0, %v585
      %v587 = vpop.f32.mrf.mxu0
      %v588 = vadd.f32 0.0, %v587
      %589 = vmatmul.bf16.gmra.mxu0 %v559
      %v590 = vpop.f32.mrf.mxu0
      %v591 = vadd.f32 0.0, %v590
      %v592 = vpop.f32.mrf.mxu0
      %v593 = vadd.f32 0.0, %v592
      %594 = vdwg.mxu0
      %v605 = vrot.slane %v571, 5
      %v606 = vrot.slane %v573, 5
      %v607 = vsel %vm331, %v605, %v606
      %v608 = vrot.slane %v576, 5
      %v609 = vsel %vm331, %v606, %v608
      %v610 = vrot.slane %v578, 5
      %v611 = vsel %vm331, %v608, %v610
      %v612 = vrot.slane %v581, 5
      %v613 = vsel %vm331, %v610, %v612
      %v614 = vrot.slane %v583, 5
      %v615 = vsel %vm331, %v612, %v614
      %v616 = vrot.slane %v586, 5
      %v617 = vsel %vm331, %v614, %v616
      %v618 = vrot.slane %v588, 5
      %v619 = vsel %vm331, %v616, %v618
      %v620 = vrot.slane %v591, 5
      %v621 = vsel %vm331, %v618, %v620
      %v622 = vrot.slane %v593, 5
      %v623 = vsel %vm331, %v620, %v622
      %v635 = vadd.f32 %v514, %v605
      %v636 = vadd.f32 %v515, %v607
      %v637 = vadd.f32 %v516, %v609
      %v638 = vadd.f32 %v517, %v611
      %v639 = vadd.f32 %v518, %v613
      %v640 = vadd.f32 %v519, %v615
      %v641 = vadd.f32 %v520, %v617
      %v642 = vadd.f32 %v521, %v619
      %v643 = vadd.f32 %v522, %v621
      %v644 = vadd.f32 %v523, %v623
      %v645 = vadd.f32 %v524, %v622
      %s646 = scalar_lea.vmem %s2, 24
      %v647 = vld [vmem:[%s646] sm:$0xf]
      %v648 = vld [vmem:[%s646 + $0x4] sm:$0xf]
      %v650 = vunpack.c.l.b16 %v224
      %v651 = vpack.c.b16 %v252, %v251
      %v652 = vpack.c.b16 %v254, %v253
      %v653 = vpack.c.b16 %v256, %v255
      %v654 = vpack.c.b16 %v258, %v257
      %v655 = vpack.c.b16 %v377, %v259
      %v656 = vpack.c.b16 %v650, %v650
      %v657 = vrot.slane %v651, 1
      %v658 = vrot.slane %v652, 1
      %v659 = vsel %vm528, %v657, %v658
      %v660 = vrot.slane %v653, 1
      %v661 = vsel %vm528, %v658, %v660
      %v662 = vrot.slane %v654, 1
      %v663 = vsel %vm528, %v660, %v662
      %v664 = vrot.slane %v655, 1
      %v665 = vsel %vm528, %v662, %v664
      %v666 = vrot.slane %v656, 1
      %v667 = vsel %vm528, %v664, %v666
      %v670 = vunpack.c.l.b16 %v647
      %v671 = vunpack.c.l.b16 %v648
      %v672 = vpack.c.b16 %v671, %v670
      %v675 = vsel %vm271, %v659, 0
      %v678 = vsel %vm271, %v661, 0
      %v681 = vsel %vm271, %v663, 0
      %v684 = vsel %vm271, %v665, 0
      %v687 = vsel %vm271, %v667, 0
      %689 = vmatpush.bf16.msra.mxu0 0
      %690 = vmatpush.bf16.msra.mxu0 0
      %691 = vmatpush.bf16.msra.mxu0 0
      %692 = vmatpush.bf16.msra.mxu0 0
      %693 = vmatpush.bf16.msra.mxu0 0
      %694 = vmatpush.bf16.msra.mxu0 0
      %695 = vmatpush.bf16.msra.mxu0 0
      %696 = vmatpush.bf16.msra.mxu0 %v672
      %697 = vmatmul.bf16.gmra.mxu0 %v675
      %v698 = vpop.f32.mrf.mxu0
      %v699 = vadd.f32 0.0, %v698
      %v700 = vpop.f32.mrf.mxu0
      %v701 = vadd.f32 0.0, %v700
      %702 = vmatmul.bf16.gmra.mxu0 %v678
      %v703 = vpop.f32.mrf.mxu0
      %v704 = vadd.f32 0.0, %v703
      %v705 = vpop.f32.mrf.mxu0
      %v706 = vadd.f32 0.0, %v705
      %707 = vmatmul.bf16.gmra.mxu0 %v681
      %v708 = vpop.f32.mrf.mxu0
      %v709 = vadd.f32 0.0, %v708
      %v710 = vpop.f32.mrf.mxu0
      %v711 = vadd.f32 0.0, %v710
      %712 = vmatmul.bf16.gmra.mxu0 %v684
      %v713 = vpop.f32.mrf.mxu0
      %v714 = vadd.f32 0.0, %v713
      %v715 = vpop.f32.mrf.mxu0
      %v716 = vadd.f32 0.0, %v715
      %717 = vmatmul.bf16.gmra.mxu0 %v687
      %v718 = vpop.f32.mrf.mxu0
      %v719 = vadd.f32 0.0, %v718
      %v720 = vpop.f32.mrf.mxu0
      %v721 = vadd.f32 0.0, %v720
      %722 = vdwg.mxu0
      %v733 = vrot.slane %v699, 5
      %v734 = vrot.slane %v701, 5
      %v735 = vsel %vm331, %v733, %v734
      %v736 = vrot.slane %v704, 5
      %v737 = vsel %vm331, %v734, %v736
      %v738 = vrot.slane %v706, 5
      %v739 = vsel %vm331, %v736, %v738
      %v740 = vrot.slane %v709, 5
      %v741 = vsel %vm331, %v738, %v740
      %v742 = vrot.slane %v711, 5
      %v743 = vsel %vm331, %v740, %v742
      %v744 = vrot.slane %v714, 5
      %v745 = vsel %vm331, %v742, %v744
      %v746 = vrot.slane %v716, 5
      %v747 = vsel %vm331, %v744, %v746
      %v748 = vrot.slane %v719, 5
      %v749 = vsel %vm331, %v746, %v748
      %v750 = vrot.slane %v721, 5
      %v751 = vsel %vm331, %v748, %v750
      %v763 = vadd.f32 %v635, %v733
      %v764 = vadd.f32 %v636, %v735
      %v765 = vadd.f32 %v637, %v737
      %v766 = vadd.f32 %v638, %v739
      %v767 = vadd.f32 %v639, %v741
      %v768 = vadd.f32 %v640, %v743
      %v769 = vadd.f32 %v641, %v745
      %v770 = vadd.f32 %v642, %v747
      %v771 = vadd.f32 %v643, %v749
      %v772 = vadd.f32 %v644, %v751
      %v773 = vadd.f32 %v645, %v750
      %s774 = scalar_lea.vmem %s2, 32
      %v775 = vld [vmem:[%s774] sm:$0xf]
      %v776 = vld [vmem:[%s774 + $0x4] sm:$0xf]
      %vm777 = vsmask.f32 6400
      %v779 = vshrl.u32 %v651, 16
      %v781 = vrot.slane %v779, 1
      %v782 = vshll.u32 %v651, 16
      %v784 = vrot.slane %v782, 2
      %v785 = vor.u32 %v781, %v784
      %v787 = vshrl.u32 %v652, 16
      %v789 = vrot.slane %v787, 1
      %v790 = vshll.u32 %v652, 16
      %v792 = vrot.slane %v790, 2
      %v793 = vor.u32 %v789, %v792
      %v794 = vsel %vm777, %v785, %v793
      %v796 = vshrl.u32 %v653, 16
      %v798 = vrot.slane %v796, 1
      %v799 = vshll.u32 %v653, 16
      %v801 = vrot.slane %v799, 2
      %v802 = vor.u32 %v798, %v801
      %v803 = vsel %vm777, %v793, %v802
      %v805 = vshrl.u32 %v654, 16
      %v807 = vrot.slane %v805, 1
      %v808 = vshll.u32 %v654, 16
      %v810 = vrot.slane %v808, 2
      %v811 = vor.u32 %v807, %v810
      %v812 = vsel %vm777, %v802, %v811
      %v814 = vshrl.u32 %v655, 16
      %v816 = vrot.slane %v814, 1
      %v817 = vshll.u32 %v655, 16
      %v819 = vrot.slane %v817, 2
      %v820 = vor.u32 %v816, %v819
      %v821 = vsel %vm777, %v811, %v820
      %v823 = vshrl.u32 %v656, 16
      %v825 = vrot.slane %v823, 1
      %v826 = vshll.u32 %v656, 16
      %v828 = vrot.slane %v826, 2
      %v829 = vor.u32 %v825, %v828
      %v830 = vsel %vm777, %v820, %v829
      %v833 = vunpack.c.l.b16 %v775
      %v834 = vunpack.c.l.b16 %v776
      %v835 = vpack.c.b16 %v834, %v833
      %v838 = vsel %vm271, %v794, 0
      %v841 = vsel %vm271, %v803, 0
      %v844 = vsel %vm271, %v812, 0
      %v847 = vsel %vm271, %v821, 0
      %v850 = vsel %vm271, %v830, 0
      %852 = vmatpush.bf16.msra.mxu0 0
      %853 = vmatpush.bf16.msra.mxu0 0
      %854 = vmatpush.bf16.msra.mxu0 0
      %855 = vmatpush.bf16.msra.mxu0 0
      %856 = vmatpush.bf16.msra.mxu0 0
      %857 = vmatpush.bf16.msra.mxu0 0
      %858 = vmatpush.bf16.msra.mxu0 0
      %859 = vmatpush.bf16.msra.mxu0 %v835
      %860 = vmatmul.bf16.gmra.mxu0 %v838
      %v861 = vpop.f32.mrf.mxu0
      %v862 = vadd.f32 0.0, %v861
      %v863 = vpop.f32.mrf.mxu0
      %v864 = vadd.f32 0.0, %v863
      %865 = vmatmul.bf16.gmra.mxu0 %v841
      %v866 = vpop.f32.mrf.mxu0
      %v867 = vadd.f32 0.0, %v866
      %v868 = vpop.f32.mrf.mxu0
      %v869 = vadd.f32 0.0, %v868
      %870 = vmatmul.bf16.gmra.mxu0 %v844
      %v871 = vpop.f32.mrf.mxu0
      %v872 = vadd.f32 0.0, %v871
      %v873 = vpop.f32.mrf.mxu0
      %v874 = vadd.f32 0.0, %v873
      %875 = vmatmul.bf16.gmra.mxu0 %v847
      %v876 = vpop.f32.mrf.mxu0
      %v877 = vadd.f32 0.0, %v876
      %v878 = vpop.f32.mrf.mxu0
      %v879 = vadd.f32 0.0, %v878
      %880 = vmatmul.bf16.gmra.mxu0 %v850
      %v881 = vpop.f32.mrf.mxu0
      %v882 = vadd.f32 0.0, %v881
      %v883 = vpop.f32.mrf.mxu0
      %v884 = vadd.f32 0.0, %v883
      %885 = vdwg.mxu0
      %v896 = vrot.slane %v862, 5
      %v897 = vrot.slane %v864, 5
      %v898 = vsel %vm331, %v896, %v897
      %v899 = vrot.slane %v867, 5
      %v900 = vsel %vm331, %v897, %v899
      %v901 = vrot.slane %v869, 5
      %v902 = vsel %vm331, %v899, %v901
      %v903 = vrot.slane %v872, 5
      %v904 = vsel %vm331, %v901, %v903
      %v905 = vrot.slane %v874, 5
      %v906 = vsel %vm331, %v903, %v905
      %v907 = vrot.slane %v877, 5
      %v908 = vsel %vm331, %v905, %v907
      %v909 = vrot.slane %v879, 5
      %v910 = vsel %vm331, %v907, %v909
      %v911 = vrot.slane %v882, 5
      %v912 = vsel %vm331, %v909, %v911
      %v913 = vrot.slane %v884, 5
      %v914 = vsel %vm331, %v911, %v913
      %v926 = vadd.f32 %v763, %v896
      %v927 = vadd.f32 %v764, %v898
      %v928 = vadd.f32 %v765, %v900
      %v929 = vadd.f32 %v766, %v902
      %v930 = vadd.f32 %v767, %v904
      %v931 = vadd.f32 %v768, %v906
      %v932 = vadd.f32 %v769, %v908
      %v933 = vadd.f32 %v770, %v910
      %v934 = vadd.f32 %v771, %v912
      %v935 = vadd.f32 %v772, %v914
      %v936 = vadd.f32 %v773, %v913
      %s937 = scalar_lea.vmem %s2, 40
      %v938 = vld [vmem:[%s937] sm:$0xf]
      %v939 = vld [vmem:[%s937 + $0x4] sm:$0xf]
      %vm940 = vcmask 1045504
      %v941 = vrot.slane %v651, 2
      %v942 = vrot.slane %v652, 2
      %v943 = vsel %vm940, %v941, %v942
      %v944 = vrot.slane %v653, 2
      %v945 = vsel %vm940, %v942, %v944
      %v946 = vrot.slane %v654, 2
      %v947 = vsel %vm940, %v944, %v946
      %v948 = vrot.slane %v655, 2
      %v949 = vsel %vm940, %v946, %v948
      %v950 = vrot.slane %v656, 2
      %v951 = vsel %vm940, %v948, %v950
      %v954 = vunpack.c.l.b16 %v938
      %v955 = vunpack.c.l.b16 %v939
      %v956 = vpack.c.b16 %v955, %v954
      %v959 = vsel %vm271, %v943, 0
      %v962 = vsel %vm271, %v945, 0
      %v965 = vsel %vm271, %v947, 0
      %v968 = vsel %vm271, %v949, 0
      %v971 = vsel %vm271, %v951, 0
      %973 = vmatpush.bf16.msra.mxu0 0
      %974 = vmatpush.bf16.msra.mxu0 0
      %975 = vmatpush.bf16.msra.mxu0 0
      %976 = vmatpush.bf16.msra.mxu0 0
      %977 = vmatpush.bf16.msra.mxu0 0
      %978 = vmatpush.bf16.msra.mxu0 0
      %979 = vmatpush.bf16.msra.mxu0 0
      %980 = vmatpush.bf16.msra.mxu0 %v956
      %981 = vmatmul.bf16.gmra.mxu0 %v959
      %v982 = vpop.f32.mrf.mxu0
      %v983 = vadd.f32 0.0, %v982
      %v984 = vpop.f32.mrf.mxu0
      %v985 = vadd.f32 0.0, %v984
      %986 = vmatmul.bf16.gmra.mxu0 %v962
      %v987 = vpop.f32.mrf.mxu0
      %v988 = vadd.f32 0.0, %v987
      %v989 = vpop.f32.mrf.mxu0
      %v990 = vadd.f32 0.0, %v989
      %991 = vmatmul.bf16.gmra.mxu0 %v965
      %v992 = vpop.f32.mrf.mxu0
      %v993 = vadd.f32 0.0, %v992
      %v994 = vpop.f32.mrf.mxu0
      %v995 = vadd.f32 0.0, %v994
      %996 = vmatmul.bf16.gmra.mxu0 %v968
      %v997 = vpop.f32.mrf.mxu0
      %v998 = vadd.f32 0.0, %v997
      %v999 = vpop.f32.mrf.mxu0
      %v1000 = vadd.f32 0.0, %v999
      %1001 = vmatmul.bf16.gmra.mxu0 %v971
      %v1002 = vpop.f32.mrf.mxu0
      %v1003 = vadd.f32 0.0, %v1002
      %v1004 = vpop.f32.mrf.mxu0
      %v1005 = vadd.f32 0.0, %v1004
      %1006 = vdwg.mxu0
      %v1017 = vrot.slane %v983, 5
      %v1018 = vrot.slane %v985, 5
      %v1019 = vsel %vm331, %v1017, %v1018
      %v1020 = vrot.slane %v988, 5
      %v1021 = vsel %vm331, %v1018, %v1020
      %v1022 = vrot.slane %v990, 5
      %v1023 = vsel %vm331, %v1020, %v1022
      %v1024 = vrot.slane %v993, 5
      %v1025 = vsel %vm331, %v1022, %v1024
      %v1026 = vrot.slane %v995, 5
      %v1027 = vsel %vm331, %v1024, %v1026
      %v1028 = vrot.slane %v998, 5
      %v1029 = vsel %vm331, %v1026, %v1028
      %v1030 = vrot.slane %v1000, 5
      %v1031 = vsel %vm331, %v1028, %v1030
      %v1032 = vrot.slane %v1003, 5
      %v1033 = vsel %vm331, %v1030, %v1032
      %v1034 = vrot.slane %v1005, 5
      %v1035 = vsel %vm331, %v1032, %v1034
      %v1047 = vadd.f32 %v926, %v1017
      %v1048 = vadd.f32 %v927, %v1019
      %v1049 = vadd.f32 %v928, %v1021
      %v1050 = vadd.f32 %v929, %v1023
      %v1051 = vadd.f32 %v930, %v1025
      %v1052 = vadd.f32 %v931, %v1027
      %v1053 = vadd.f32 %v932, %v1029
      %v1054 = vadd.f32 %v933, %v1031
      %v1055 = vadd.f32 %v934, %v1033
      %v1056 = vadd.f32 %v935, %v1035
      %v1057 = vadd.f32 %v936, %v1034
      %s1058 = scalar_lea.vmem %s2, 48
      %v1059 = vld [vmem:[%s1058] sm:$0xf]
      %v1060 = vld [vmem:[%s1058 + $0x4] sm:$0xf]
      %v1062 = vunpack.c.l.b16 %v225
      %v1063 = vpack.c.b16 %v650, %v377
      %v1064 = vpack.c.b16 %v1062, %v1062
      %v1065 = vrot.slane %v261, 2
      %v1066 = vrot.slane %v262, 2
      %v1067 = vsel %vm940, %v1065, %v1066
      %v1068 = vrot.slane %v263, 2
      %v1069 = vsel %vm940, %v1066, %v1068
      %v1070 = vrot.slane %v264, 2
      %v1071 = vsel %vm940, %v1068, %v1070
      %v1072 = vrot.slane %v1063, 2
      %v1073 = vsel %vm940, %v1070, %v1072
      %v1074 = vrot.slane %v1064, 2
      %v1075 = vsel %vm940, %v1072, %v1074
      %v1078 = vunpack.c.l.b16 %v1059
      %v1079 = vunpack.c.l.b16 %v1060
      %v1080 = vpack.c.b16 %v1079, %v1078
      %v1083 = vsel %vm271, %v1067, 0
      %v1086 = vsel %vm271, %v1069, 0
      %v1089 = vsel %vm271, %v1071, 0
      %v1092 = vsel %vm271, %v1073, 0
      %v1095 = vsel %vm271, %v1075, 0
      %1097 = vmatpush.bf16.msra.mxu0 0
      %1098 = vmatpush.bf16.msra.mxu0 0
      %1099 = vmatpush.bf16.msra.mxu0 0
      %1100 = vmatpush.bf16.msra.mxu0 0
      %1101 = vmatpush.bf16.msra.mxu0 0
      %1102 = vmatpush.bf16.msra.mxu0 0
      %1103 = vmatpush.bf16.msra.mxu0 0
      %1104 = vmatpush.bf16.msra.mxu0 %v1080
      %1105 = vmatmul.bf16.gmra.mxu0 %v1083
      %v1106 = vpop.f32.mrf.mxu0
      %v1107 = vadd.f32 0.0, %v1106
      %v1108 = vpop.f32.mrf.mxu0
      %v1109 = vadd.f32 0.0, %v1108
      %1110 = vmatmul.bf16.gmra.mxu0 %v1086
      %v1111 = vpop.f32.mrf.mxu0
      %v1112 = vadd.f32 0.0, %v1111
      %v1113 = vpop.f32.mrf.mxu0
      %v1114 = vadd.f32 0.0, %v1113
      %1115 = vmatmul.bf16.gmra.mxu0 %v1089
      %v1116 = vpop.f32.mrf.mxu0
      %v1117 = vadd.f32 0.0, %v1116
      %v1118 = vpop.f32.mrf.mxu0
      %v1119 = vadd.f32 0.0, %v1118
      %1120 = vmatmul.bf16.gmra.mxu0 %v1092
      %v1121 = vpop.f32.mrf.mxu0
      %v1122 = vadd.f32 0.0, %v1121
      %v1123 = vpop.f32.mrf.mxu0
      %v1124 = vadd.f32 0.0, %v1123
      %1125 = vmatmul.bf16.gmra.mxu0 %v1095
      %v1126 = vpop.f32.mrf.mxu0
      %v1127 = vadd.f32 0.0, %v1126
      %v1128 = vpop.f32.mrf.mxu0
      %v1129 = vadd.f32 0.0, %v1128
      %1130 = vdwg.mxu0
      %v1141 = vrot.slane %v1107, 5
      %v1142 = vrot.slane %v1109, 5
      %v1143 = vsel %vm331, %v1141, %v1142
      %v1144 = vrot.slane %v1112, 5
      %v1145 = vsel %vm331, %v1142, %v1144
      %v1146 = vrot.slane %v1114, 5
      %v1147 = vsel %vm331, %v1144, %v1146
      %v1148 = vrot.slane %v1117, 5
      %v1149 = vsel %vm331, %v1146, %v1148
      %v1150 = vrot.slane %v1119, 5
      %v1151 = vsel %vm331, %v1148, %v1150
      %v1152 = vrot.slane %v1122, 5
      %v1153 = vsel %vm331, %v1150, %v1152
      %v1154 = vrot.slane %v1124, 5
      %v1155 = vsel %vm331, %v1152, %v1154
      %v1156 = vrot.slane %v1127, 5
      %v1157 = vsel %vm331, %v1154, %v1156
      %v1158 = vrot.slane %v1129, 5
      %v1159 = vsel %vm331, %v1156, %v1158
      %v1171 = vadd.f32 %v1047, %v1141
      %v1172 = vadd.f32 %v1048, %v1143
      %v1173 = vadd.f32 %v1049, %v1145
      %v1174 = vadd.f32 %v1050, %v1147
      %v1175 = vadd.f32 %v1051, %v1149
      %v1176 = vadd.f32 %v1052, %v1151
      %v1177 = vadd.f32 %v1053, %v1153
      %v1178 = vadd.f32 %v1054, %v1155
      %v1179 = vadd.f32 %v1055, %v1157
      %v1180 = vadd.f32 %v1056, %v1159
      %v1181 = vadd.f32 %v1057, %v1158
      %s1182 = scalar_lea.vmem %s2, 56
      %v1183 = vld [vmem:[%s1182] sm:$0xf]
      %v1184 = vld [vmem:[%s1182 + $0x4] sm:$0xf]
      %vm1185 = vsmask.f32 5376
      %v1186 = vrot.slane %v390, 2
      %v1187 = vrot.slane %v386, 3
      %v1188 = vor.u32 %v1186, %v1187
      %v1189 = vrot.slane %v397, 2
      %v1190 = vrot.slane %v393, 3
      %v1191 = vor.u32 %v1189, %v1190
      %v1192 = vsel %vm1185, %v1188, %v1191
      %v1193 = vrot.slane %v404, 2
      %v1194 = vrot.slane %v400, 3
      %v1195 = vor.u32 %v1193, %v1194
      %v1196 = vsel %vm1185, %v1191, %v1195
      %v1197 = vrot.slane %v411, 2
      %v1198 = vrot.slane %v407, 3
      %v1199 = vor.u32 %v1197, %v1198
      %v1200 = vsel %vm1185, %v1195, %v1199
      %v1202 = vshrl.u32 %v1063, 16
      %v1204 = vrot.slane %v1202, 2
      %v1205 = vshll.u32 %v1063, 16
      %v1207 = vrot.slane %v1205, 3
      %v1208 = vor.u32 %v1204, %v1207
      %v1209 = vsel %vm1185, %v1199, %v1208
      %v1211 = vshrl.u32 %v1064, 16
      %v1213 = vrot.slane %v1211, 2
      %v1214 = vshll.u32 %v1064, 16
      %v1216 = vrot.slane %v1214, 3
      %v1217 = vor.u32 %v1213, %v1216
      %v1218 = vsel %vm1185, %v1208, %v1217
      %v1221 = vunpack.c.l.b16 %v1183
      %v1222 = vunpack.c.l.b16 %v1184
      %v1223 = vpack.c.b16 %v1222, %v1221
      %v1226 = vsel %vm271, %v1192, 0
      %v1229 = vsel %vm271, %v1196, 0
      %v1232 = vsel %vm271, %v1200, 0
      %v1235 = vsel %vm271, %v1209, 0
      %v1238 = vsel %vm271, %v1218, 0
      %1240 = vmatpush.bf16.msra.mxu0 0
      %1241 = vmatpush.bf16.msra.mxu0 0
      %1242 = vmatpush.bf16.msra.mxu0 0
      %1243 = vmatpush.bf16.msra.mxu0 0
      %1244 = vmatpush.bf16.msra.mxu0 0
      %1245 = vmatpush.bf16.msra.mxu0 0
      %1246 = vmatpush.bf16.msra.mxu0 0
      %1247 = vmatpush.bf16.msra.mxu0 %v1223
      %1248 = vmatmul.bf16.gmra.mxu0 %v1226
      %v1249 = vpop.f32.mrf.mxu0
      %v1250 = vadd.f32 0.0, %v1249
      %v1251 = vpop.f32.mrf.mxu0
      %v1252 = vadd.f32 0.0, %v1251
      %1253 = vmatmul.bf16.gmra.mxu0 %v1229
      %v1254 = vpop.f32.mrf.mxu0
      %v1255 = vadd.f32 0.0, %v1254
      %v1256 = vpop.f32.mrf.mxu0
      %v1257 = vadd.f32 0.0, %v1256
      %1258 = vmatmul.bf16.gmra.mxu0 %v1232
      %v1259 = vpop.f32.mrf.mxu0
      %v1260 = vadd.f32 0.0, %v1259
      %v1261 = vpop.f32.mrf.mxu0
      %v1262 = vadd.f32 0.0, %v1261
      %1263 = vmatmul.bf16.gmra.mxu0 %v1235
      %v1264 = vpop.f32.mrf.mxu0
      %v1265 = vadd.f32 0.0, %v1264
      %v1266 = vpop.f32.mrf.mxu0
      %v1267 = vadd.f32 0.0, %v1266
      %1268 = vmatmul.bf16.gmra.mxu0 %v1238
      %v1269 = vpop.f32.mrf.mxu0
      %v1270 = vadd.f32 0.0, %v1269
      %v1271 = vpop.f32.mrf.mxu0
      %v1272 = vadd.f32 0.0, %v1271
      %1273 = vdwg.mxu0
      %v1284 = vrot.slane %v1250, 5
      %v1285 = vrot.slane %v1252, 5
      %v1286 = vsel %vm331, %v1284, %v1285
      %v1287 = vrot.slane %v1255, 5
      %v1288 = vsel %vm331, %v1285, %v1287
      %v1289 = vrot.slane %v1257, 5
      %v1290 = vsel %vm331, %v1287, %v1289
      %v1291 = vrot.slane %v1260, 5
      %v1292 = vsel %vm331, %v1289, %v1291
      %v1293 = vrot.slane %v1262, 5
      %v1294 = vsel %vm331, %v1291, %v1293
      %v1295 = vrot.slane %v1265, 5
      %v1296 = vsel %vm331, %v1293, %v1295
      %v1297 = vrot.slane %v1267, 5
      %v1298 = vsel %vm331, %v1295, %v1297
      %v1299 = vrot.slane %v1270, 5
      %v1300 = vsel %vm331, %v1297, %v1299
      %v1301 = vrot.slane %v1272, 5
      %v1302 = vsel %vm331, %v1299, %v1301
      %v1314 = vadd.f32 %v1171, %v1284
      %v1315 = vadd.f32 %v1172, %v1286
      %v1316 = vadd.f32 %v1173, %v1288
      %v1317 = vadd.f32 %v1174, %v1290
      %v1318 = vadd.f32 %v1175, %v1292
      %v1319 = vadd.f32 %v1176, %v1294
      %v1320 = vadd.f32 %v1177, %v1296
      %v1321 = vadd.f32 %v1178, %v1298
      %v1322 = vadd.f32 %v1179, %v1300
      %v1323 = vadd.f32 %v1180, %v1302
      %v1324 = vadd.f32 %v1181, %v1301
      %s1325 = scalar_lea.vmem %s2, 64
      %v1326 = vld [vmem:[%s1325] sm:$0xf]
      %v1327 = vld [vmem:[%s1325 + $0x4] sm:$0xf]
      %vm1328 = vcmask 1044480
      %v1329 = vrot.slane %v261, 3
      %v1330 = vrot.slane %v262, 3
      %v1331 = vsel %vm1328, %v1329, %v1330
      %v1332 = vrot.slane %v263, 3
      %v1333 = vsel %vm1328, %v1330, %v1332
      %v1334 = vrot.slane %v264, 3
      %v1335 = vsel %vm1328, %v1332, %v1334
      %v1336 = vrot.slane %v1063, 3
      %v1337 = vsel %vm1328, %v1334, %v1336
      %v1338 = vrot.slane %v1064, 3
      %v1339 = vsel %vm1328, %v1336, %v1338
      %v1342 = vunpack.c.l.b16 %v1326
      %v1343 = vunpack.c.l.b16 %v1327
      %v1344 = vpack.c.b16 %v1343, %v1342
      %v1347 = vsel %vm271, %v1331, 0
      %v1350 = vsel %vm271, %v1333, 0
      %v1353 = vsel %vm271, %v1335, 0
      %v1356 = vsel %vm271, %v1337, 0
      %v1359 = vsel %vm271, %v1339, 0
      %1361 = vmatpush.bf16.msra.mxu0 0
      %1362 = vmatpush.bf16.msra.mxu0 0
      %1363 = vmatpush.bf16.msra.mxu0 0
      %1364 = vmatpush.bf16.msra.mxu0 0
      %1365 = vmatpush.bf16.msra.mxu0 0
      %1366 = vmatpush.bf16.msra.mxu0 0
      %1367 = vmatpush.bf16.msra.mxu0 0
      %1368 = vmatpush.bf16.msra.mxu0 %v1344
      %1369 = vmatmul.bf16.gmra.mxu0 %v1347
      %v1370 = vpop.f32.mrf.mxu0
      %v1371 = vadd.f32 0.0, %v1370
      %v1372 = vpop.f32.mrf.mxu0
      %v1373 = vadd.f32 0.0, %v1372
      %1374 = vmatmul.bf16.gmra.mxu0 %v1350
      %v1375 = vpop.f32.mrf.mxu0
      %v1376 = vadd.f32 0.0, %v1375
      %v1377 = vpop.f32.mrf.mxu0
      %v1378 = vadd.f32 0.0, %v1377
      %1379 = vmatmul.bf16.gmra.mxu0 %v1353
      %v1380 = vpop.f32.mrf.mxu0
      %v1381 = vadd.f32 0.0, %v1380
      %v1382 = vpop.f32.mrf.mxu0
      %v1383 = vadd.f32 0.0, %v1382
      %1384 = vmatmul.bf16.gmra.mxu0 %v1356
      %v1385 = vpop.f32.mrf.mxu0
      %v1386 = vadd.f32 0.0, %v1385
      %v1387 = vpop.f32.mrf.mxu0
      %v1388 = vadd.f32 0.0, %v1387
      %1389 = vmatmul.bf16.gmra.mxu0 %v1359
      %v1390 = vpop.f32.mrf.mxu0
      %v1391 = vadd.f32 0.0, %v1390
      %v1392 = vpop.f32.mrf.mxu0
      %v1393 = vadd.f32 0.0, %v1392
      %1394 = vdwg.mxu0
      %v1405 = vrot.slane %v1371, 5
      %v1406 = vrot.slane %v1373, 5
      %v1407 = vsel %vm331, %v1405, %v1406
      %v1408 = vrot.slane %v1376, 5
      %v1409 = vsel %vm331, %v1406, %v1408
      %v1410 = vrot.slane %v1378, 5
      %v1411 = vsel %vm331, %v1408, %v1410
      %v1412 = vrot.slane %v1381, 5
      %v1413 = vsel %vm331, %v1410, %v1412
      %v1414 = vrot.slane %v1383, 5
      %v1415 = vsel %vm331, %v1412, %v1414
      %v1416 = vrot.slane %v1386, 5
      %v1417 = vsel %vm331, %v1414, %v1416
      %v1418 = vrot.slane %v1388, 5
      %v1419 = vsel %vm331, %v1416, %v1418
      %v1420 = vrot.slane %v1391, 5
      %v1421 = vsel %vm331, %v1418, %v1420
      %v1422 = vrot.slane %v1393, 5
      %v1423 = vsel %vm331, %v1420, %v1422
      %v1435 = vadd.f32 %v1314, %v1405
      %v1436 = vadd.f32 %v1315, %v1407
      %v1437 = vadd.f32 %v1316, %v1409
      %v1438 = vadd.f32 %v1317, %v1411
      %v1439 = vadd.f32 %v1318, %v1413
      %v1440 = vadd.f32 %v1319, %v1415
      %v1441 = vadd.f32 %v1320, %v1417
      %v1442 = vadd.f32 %v1321, %v1419
      %v1443 = vadd.f32 %v1322, %v1421
      %v1444 = vadd.f32 %v1323, %v1423
      %v1445 = vadd.f32 %v1324, %v1422
      %v1446 = vpack.c.bf16 %v1435, %v1435
      %v1447 = vpack.c.bf16 %v1436, %v1436
      %v1448 = vpack.c.bf16 %v1437, %v1437
      %v1449 = vpack.c.bf16 %v1438, %v1438
      %v1450 = vpack.c.bf16 %v1439, %v1439
      %v1451 = vpack.c.bf16 %v1440, %v1440
      %v1452 = vpack.c.bf16 %v1441, %v1441
      %v1453 = vpack.c.bf16 %v1442, %v1442
      %v1454 = vpack.c.bf16 %v1443, %v1443
      %v1455 = vpack.c.bf16 %v1444, %v1444
      %v1456 = vpack.c.bf16 %v1445, %v1445
      %vm1457 = vsmask.f32 2304
      %vm1458 = vsmask.f32 6416
      %vm1459 = vmor %vm1457, %vm1458
      %v1461 = vshrl.u32 %v1446, 16
      %v1463 = vrot.slane %v1461, 5
      %v1464 = vshll.u32 %v1446, 16
      %v1466 = vrot.slane %v1464, 6
      %v1467 = vor.u32 %v1463, %v1466
      %v1468 = vrot.slane %v1467, 4
      %v1470 = vshrl.u32 %v1447, 16
      %v1472 = vrot.slane %v1470, 5
      %v1473 = vshll.u32 %v1447, 16
      %v1475 = vrot.slane %v1473, 6
      %v1476 = vor.u32 %v1472, %v1475
      %v1477 = vsel %vm1459, %v1468, %v1476
      %v1478 = vrot.slane %v1476, 4
      %v1480 = vshrl.u32 %v1448, 16
      %v1482 = vrot.slane %v1480, 5
      %v1483 = vshll.u32 %v1448, 16
      %v1485 = vrot.slane %v1483, 6
      %v1486 = vor.u32 %v1482, %v1485
      %v1487 = vsel %vm1459, %v1478, %v1486
      %v1488 = vrot.slane %v1486, 4
      %v1490 = vshrl.u32 %v1449, 16
      %v1492 = vrot.slane %v1490, 5
      %v1493 = vshll.u32 %v1449, 16
      %v1495 = vrot.slane %v1493, 6
      %v1496 = vor.u32 %v1492, %v1495
      %v1497 = vsel %vm1459, %v1488, %v1496
      %v1498 = vrot.slane %v1496, 4
      %v1500 = vshrl.u32 %v1450, 16
      %v1502 = vrot.slane %v1500, 5
      %v1503 = vshll.u32 %v1450, 16
      %v1505 = vrot.slane %v1503, 6
      %v1506 = vor.u32 %v1502, %v1505
      %v1507 = vsel %vm1459, %v1498, %v1506
      %v1508 = vrot.slane %v1506, 4
      %v1510 = vshrl.u32 %v1451, 16
      %v1512 = vrot.slane %v1510, 5
      %v1513 = vshll.u32 %v1451, 16
      %v1515 = vrot.slane %v1513, 6
      %v1516 = vor.u32 %v1512, %v1515
      %v1517 = vsel %vm1459, %v1508, %v1516
      %v1518 = vrot.slane %v1516, 4
      %v1520 = vshrl.u32 %v1452, 16
      %v1522 = vrot.slane %v1520, 5
      %v1523 = vshll.u32 %v1452, 16
      %v1525 = vrot.slane %v1523, 6
      %v1526 = vor.u32 %v1522, %v1525
      %v1527 = vsel %vm1459, %v1518, %v1526
      %v1528 = vrot.slane %v1526, 4
      %v1530 = vshrl.u32 %v1453, 16
      %v1532 = vrot.slane %v1530, 5
      %v1533 = vshll.u32 %v1453, 16
      %v1535 = vrot.slane %v1533, 6
      %v1536 = vor.u32 %v1532, %v1535
      %v1537 = vsel %vm1459, %v1528, %v1536
      %v1538 = vrot.slane %v1536, 4
      %v1540 = vshrl.u32 %v1454, 16
      %v1542 = vrot.slane %v1540, 5
      %v1543 = vshll.u32 %v1454, 16
      %v1545 = vrot.slane %v1543, 6
      %v1546 = vor.u32 %v1542, %v1545
      %v1547 = vsel %vm1459, %v1538, %v1546
      %v1548 = vrot.slane %v1546, 4
      %v1550 = vshrl.u32 %v1455, 16
      %v1552 = vrot.slane %v1550, 5
      %v1553 = vshll.u32 %v1455, 16
      %v1555 = vrot.slane %v1553, 6
      %v1556 = vor.u32 %v1552, %v1555
      %v1557 = vsel %vm1459, %v1548, %v1556
      %v1558 = vrot.slane %v1556, 4
      %v1560 = vshrl.u32 %v1456, 16
      %v1562 = vrot.slane %v1560, 5
      %v1563 = vshll.u32 %v1456, 16
      %v1565 = vrot.slane %v1563, 6
      %v1566 = vor.u32 %v1562, %v1565
      %v1567 = vsel %vm1459, %v1558, %v1566
      %vm1578 = vcmask 125952
      %1579 = vst.msk [vmem:[%s171] sm:$0xf] %vm1578, %v1477
      %1580 = vst.msk [vmem:[%s171 + $0x4] sm:$0xf] %vm1578, %v1487
      %1581 = vst.msk [vmem:[%s171 + $0x8] sm:$0xf] %vm1578, %v1497
      %1582 = vst.msk [vmem:[%s171 + $0xc] sm:$0xf] %vm1578, %v1507
      %1583 = vst.msk [vmem:[%s171 + $0x10] sm:$0xf] %vm1578, %v1517
      %1584 = vst.msk [vmem:[%s171 + $0x14] sm:$0xf] %vm1578, %v1527
      %1585 = vst.msk [vmem:[%s171 + $0x18] sm:$0xf] %vm1578, %v1537
      %1586 = vst.msk [vmem:[%s171 + $0x1c] sm:$0xf] %vm1578, %v1547
      %1587 = vst.msk [vmem:[%s171 + $0x20] sm:$0xf] %vm1578, %v1557
      %1588 = vst.msk [vmem:[%s171 + $0x24] sm:$0xf] %vm1578, %v1567
      %p1589 = scmp.lt.s32.totalorder %s15, 1
      %s1590 = scalar_select %p1589, %s15, 1
      %s1591 = smul.addr %s1590, 10
      %s1592 = smul.addr %s1591, 4
      %s1593 = scalar_lea.vmem %s3, %s1592
      // Predicated region
      $region33: #{cell_forward.2} parent=31 // pred_check
        %p1594 = pneg %p101
      $region34: #{cell_forward.2} parent=31 // pred_check_branch
        %1596 = sbr.rel (%p1594) target = $region36
      $region35: #{cell_forward.2} parent=31 // pred_region
        _
      $region36: #{cell_forward.2} parent=31 // pred_fallthru
        _
    $region32: #{cell_forward.2} parent=5 // pred_fallthru
      _
    %p1597 = scmp.le.s32.totalorder 2, %s10
    // Predicated region
    $region37: #{cell_forward.2} parent=5 // pred_check
      %p1598 = pneg %p1597
    $region38: #{cell_forward.2} parent=5 // pred_check_branch
      %1600 = sbr.rel (%p1598) target = $region40
    $region39: #{cell_forward.2} parent=5 // pred_region
      %s1601 = ssub.s32 %s10, 2
      // Predicated region
      $region41: #{cell_forward.2} parent=39 // pred_check
        %p1602 = pneg %p107
      $region42: #{cell_forward.2} parent=39 // pred_check_branch
        %1604 = sbr.rel (%p1602) target = $region44
      $region43: #{cell_forward.2} parent=39 // pred_region
        %p1605 = scmp.lt.s32.totalorder %s16, 1
        %s1606 = scalar_select %p1605, %s16, 1
        %s1607 = smul.addr %s1606, 10
        %s1608 = smul.addr %s1607, 4
        %s1609 = scalar_lea.vmem %s3, %s1608
      $region44: #{cell_forward.2} parent=39 // pred_fallthru
        _
    $region40: #{cell_forward.2} parent=5 // pred_fallthru
      _
  $region6: #{cell_forward.2} parent=0 // loop_footer
    %s14 = sadd.s32 1, %s10
  $region7: #{cell_forward.2} parent=0 // loop_footer_branch
    %9 = sbr.rel target = $region3
  $region8: #{cell_forward.2} parent=0 // loop_exit
    _

// kernel: cell_forward.3
$region0: #{cell_forward.3}
  #allocation0 [shape = 'u32[]', space=smem, size = 0x4, offset = 0x4, fixed_abs, tag = 'smem constant byte address 0x4 - core index']
  #allocation1 [shape = 'u32[72,128]{1,0:T(1,128)}', space=vmem, size = 0x9000, scoped, tag = 'internal scratch']
  #allocation2 [shape = 'f32[1]{0:T(128)S(6)}', space=smem, size = 0x200, scoped, tag = 'scoped memory for cell_forward.3']
  %s0 = inlined_call_operand.<no memory space> [shape: f32[1], index: 0, kind: input, shape index: {}]
  %s1 = inlined_call_operand.vmem [shape: bf16[2,38,64], index: 1, kind: input, shape index: {}]
  %s2 = inlined_call_operand.vmem [shape: bf16[9,64,64], index: 2, kind: input, shape index: {}]
  %s3 = inlined_call_operand.vmem [shape: bf16[2,24,64], index: 3, kind: output, shape index: {}]
  %s4 = sld [smem:[#allocation0]]
  $region45: #{cell_forward.3} parent=0
    _
  %s6 = ssub.s32 1, %s4
  %s7 = scalar_select 0, %s6, %s4
  %8 = sst [smem:[#allocation2]] %s0
  loop: start=0, step=1, limit=4
  $region2: #{cell_forward.3} parent=0 // loop_pre_header
    _
  $region3: #{cell_forward.3} parent=0 // loop_header
    %s10 = sphi 0, %s14
    %p11 = scmp.ge.s32.totalorder %s10, 4
    %s18 = sphi 0, %s18
    %s20 = sphi 0, %s18
    %s21 = sphi 0, %s20
    %s35 = sphi 0, %s21
    %s41 = sphi 0, %s43
    %s44 = sphi 0, %s41
    %s45 = sphi 0, %s44
    %s61 = sphi 0, %s45
    %s65 = sphi 0, %s65
    %s67 = sphi 0, %s65
    %s68 = sphi 0, %s67
    %s82 = sphi 0, %s68
    %s88 = sphi 0, %s90
    %s91 = sphi 0, %s88
    %s92 = sphi 0, %s91
    %s108 = sphi 0, %s92
  $region4: #{cell_forward.3} parent=0 // loop_header_branch
    %13 = sbr.rel (%p11) target = $region8
  $region5: #{cell_forward.3} parent=0 // loop_body
    %s15 = ssub.s32 %s10, 1
    %s16 = ssub.s32 %s10, 2
    %s17 = sadd.s32 %s10, 1
    %s19 = sadd.s32 %s18, 1
    %p22 = scmp.eq.s32.totalorder %s10, 1
    %p23 = scmp.ne.s32.totalorder %s18, %s20
    %p24 = scmp.eq.s32.totalorder %s10, 0
    %p25 = por %p23, %p24
    %p26 = scmp.ne.s32.totalorder %s18, %s20
    %p27 = scmp.eq.s32.totalorder %s15, 1
    %p28 = por %p26, %p27
    %p29 = scmp.ne.s32.totalorder %s20, %s21
    %p30 = scmp.eq.s32.totalorder %s15, 0
    %p31 = por %p29, %p30
    %p32 = scmp.ne.s32.totalorder %s20, %s21
    %p33 = scmp.eq.s32.totalorder %s16, 1
    %p34 = por %p32, %p33
    %p36 = scmp.ne.s32.totalorder %s21, %s35
    %p37 = scmp.eq.s32.totalorder %s16, 0
    %p38 = por %p36, %p37
    %s39 = ssub.s32 %s10, %s17
    %p40 = scmp.eq.s32.totalorder %s39, 0
    %s42 = sadd.s32 %s41, 1
    %s43 = scalar_select %p40, %s41, %s42
    %p46 = pneg %p40
    %p47 = scmp.eq.s32.totalorder %s10, 1
    %p48 = por %p46, %p47
    %p49 = scmp.ne.s32.totalorder %s41, %s44
    %p50 = scmp.eq.s32.totalorder %s10, 0
    %p51 = por %p49, %p50
    %p52 = scmp.ne.s32.totalorder %s41, %s44
    %p53 = scmp.eq.s32.totalorder %s15, 1
    %p54 = por %p52, %p53
    %p55 = scmp.ne.s32.totalorder %s44, %s45
    %p56 = scmp.eq.s32.totalorder %s15, 0
    %p57 = por %p55, %p56
    %p58 = scmp.ne.s32.totalorder %s44, %s45
    %p59 = scmp.eq.s32.totalorder %s16, 1
    %p60 = por %p58, %p59
    %p62 = scmp.ne.s32.totalorder %s45, %s61
    %p63 = scmp.eq.s32.totalorder %s16, 0
    %p64 = por %p62, %p63
    %s66 = sadd.s32 %s65, 1
    %p69 = scmp.eq.s32.totalorder %s10, 1
    %p70 = scmp.ne.s32.totalorder %s65, %s67
    %p71 = scmp.eq.s32.totalorder %s10, 0
    %p72 = por %p70, %p71
    %p73 = scmp.ne.s32.totalorder %s65, %s67
    %p74 = scmp.eq.s32.totalorder %s15, 1
    %p75 = por %p73, %p74
    %p76 = scmp.ne.s32.totalorder %s67, %s68
    %p77 = scmp.eq.s32.totalorder %s15, 0
    %p78 = por %p76, %p77
    %p79 = scmp.ne.s32.totalorder %s67, %s68
    %p80 = scmp.eq.s32.totalorder %s16, 1
    %p81 = por %p79, %p80
    %p83 = scmp.ne.s32.totalorder %s68, %s82
    %p84 = scmp.eq.s32.totalorder %s16, 0
    %p85 = por %p83, %p84
    %s86 = ssub.s32 %s10, %s17
    %p87 = scmp.eq.s32.totalorder %s86, 0
    %s89 = sadd.s32 %s88, 1
    %s90 = scalar_select %p87, %s88, %s89
    %p93 = pneg %p87
    %p94 = scmp.eq.s32.totalorder %s10, 1
    %p95 = por %p93, %p94
    %p96 = scmp.ne.s32.totalorder %s88, %s91
    %p97 = scmp.eq.s32.totalorder %s10, 0
    %p98 = por %p96, %p97
    %p99 = scmp.ne.s32.totalorder %s88, %s91
    %p100 = scmp.eq.s32.totalorder %s15, 1
    %p101 = por %p99, %p100
    %p102 = scmp.ne.s32.totalorder %s91, %s92
    %p103 = scmp.eq.s32.totalorder %s15, 0
    %p104 = por %p102, %p103
    %p105 = scmp.ne.s32.totalorder %s91, %s92
    %p106 = scmp.eq.s32.totalorder %s16, 1
    %p107 = por %p105, %p106
    %p109 = scmp.ne.s32.totalorder %s92, %s108
    %p110 = scmp.eq.s32.totalorder %s16, 0
    %p111 = por %p109, %p110
    %p112 = scmp.le.s32.totalorder 1, %s10
    %p113 = scmp.lt.s32.totalorder %s10, 3
    %p114 = pnand %p112, %p113
    %p115 = pneg %p114
    // Predicated region
    $region9: #{cell_forward.3} parent=5 // pred_check
      _
    $region10: #{cell_forward.3} parent=5 // pred_check_branch
      %117 = sbr.rel (%p114) target = $region12
    $region11: #{cell_forward.3} parent=5 // pred_region
      %s118 = ssub.s32 %s10, 1
      // Predicated region
      $region13: #{cell_forward.3} parent=11 // pred_check
        %p119 = pneg %p31
      $region14: #{cell_forward.3} parent=11 // pred_check_branch
        %121 = sbr.rel (%p119) target = $region16
      $region15: #{cell_forward.3} parent=11 // pred_region
        _
      $region16: #{cell_forward.3} parent=11 // pred_fallthru
        _
      // Predicated region
      $region17: #{cell_forward.3} parent=11 // pred_check
        %p122 = pneg %p78
      $region18: #{cell_forward.3} parent=11 // pred_check_branch
        %124 = sbr.rel (%p122) target = $region20
      $region19: #{cell_forward.3} parent=11 // pred_region
        _
      $region20: #{cell_forward.3} parent=11 // pred_fallthru
        _
    $region12: #{cell_forward.3} parent=5 // pred_fallthru
      _
    %p125 = scmp.lt.s32.totalorder %s10, 2
    // Predicated region
    $region21: #{cell_forward.3} parent=5 // pred_check
      %p126 = pneg %p125
    $region22: #{cell_forward.3} parent=5 // pred_check_branch
      %128 = sbr.rel (%p126) target = $region24
    $region23: #{cell_forward.3} parent=5 // pred_region
      // Predicated region
      $region25: #{cell_forward.3} parent=23 // pred_check
        %p129 = pneg %p51
      $region26: #{cell_forward.3} parent=23 // pred_check_branch
        %131 = sbr.rel (%p129) target = $region28
      $region27: #{cell_forward.3} parent=23 // pred_region
        %p132 = scmp.lt.s32.totalorder %s10, 1
        %s133 = scalar_select %p132, %s10, 1
        %s134 = smul.addr %s133, 5
        %s135 = smul.addr %s134, 4
        %s136 = scalar_lea.vmem %s1, %s135
      $region28: #{cell_forward.3} parent=23 // pred_fallthru
        _
    $region24: #{cell_forward.3} parent=5 // pred_fallthru
      _
    %p137 = scmp.le.s32.totalorder 1, %s10
    %p138 = scmp.lt.s32.totalorder %s10, 3
    %p139 = pnand %p137, %p138
    %p140 = pneg %p139
    // Predicated region
    $region29: #{cell_forward.3} parent=5 // pred_check
      _
    $region30: #{cell_forward.3} parent=5 // pred_check_branch
      %142 = sbr.rel (%p139) target = $region32
    $region31: #{cell_forward.3} parent=5 // pred_region
      %s143 = ssub.s32 %s10, 1
      %p144 = pneg %p31
      %p145 = pneg %p28
      %p146 = scmp.lt.s32.totalorder %s15, 1
      %s147 = scalar_select %p146, %s15, 1
      %s148 = smul.addr %s147, 5
      %s149 = smul.addr %s148, 4
      %s150 = scalar_lea.vmem %s1, %s149
      %p151 = pneg %p57
      %p152 = pneg %p54
      %p153 = pneg %p78
      %p154 = pneg %p75
      %p155 = pneg %p104
      %p156 = pneg %p101
      %p157 = scmp.lt.s32.totalorder %s15, 1
      %s158 = scalar_select %p157, %s15, 1
      %s159 = smul.addr %s158, 3
      %s160 = smul.addr %s159, 4
      %s161 = scalar_lea.vmem %s3, %s160
      %p162 = scmp.lt.s32.totalorder %s15, 1
      %s163 = scalar_select %p162, %s15, 1
      %s164 = smul.addr %s163, 5
      %s165 = smul.addr %s164, 4
      %s166 = scalar_lea.vmem %s1, %s165
      %p167 = scmp.lt.s32.totalorder %s15, 1
      %s168 = scalar_select %p167, %s15, 1
      %s169 = smul.addr %s168, 3
      %s170 = smul.addr %s169, 4
      %s171 = scalar_lea.vmem %s3, %s170
      %s173 = sld [smem:[#allocation2]]
      %v174 = vld [vmem:[%s166] sm:$0xf]
      %v175 = vld [vmem:[%s166 + $0x4] sm:$0xf]
      %v176 = vld [vmem:[%s166 + $0x8] sm:$0xf]
      %v177 = vld [vmem:[%s166 + $0xc] sm:$0xf]
      %v178 = vld [vmem:[%s166 + $0x10] sm:$0x7]
      %v179 = vunpack.c.l.bf16 %v174
      %v180 = vunpack.c.l.bf16 %v175
      %v181 = vunpack.c.l.bf16 %v176
      %v182 = vunpack.c.l.bf16 %v177
      %v183 = vunpack.c.l.bf16 %v178
      %v184 = vmax.f32 %v179, 0.0
      %v185 = vmax.f32 %v180, 0.0
      %v186 = vmax.f32 %v181, 0.0
      %v187 = vmax.f32 %v182, 0.0
      %v188 = vmax.f32 %v183, 0.0
      %v189 = vpack.c.bf16 %v184, %v184
      %v190 = vpack.c.bf16 %v185, %v185
      %v191 = vpack.c.bf16 %v186, %v186
      %v192 = vpack.c.bf16 %v187, %v187
      %v193 = vpack.c.bf16 %v188, %v188
      %v194 = vstv %s173
      %v195 = vmul.f32 %v194, %v179
      %v196 = vmul.f32 %v194, %v180
      %v197 = vmul.f32 %v194, %v181
      %v198 = vmul.f32 %v194, %v182
      %v199 = vld [vmem:[%s2] sm:$0xf]
      %v200 = vld [vmem:[%s2 + $0x4] sm:$0xf]
      %v201 = vld [vmem:[%s2 + $0x8] sm:$0xf]
      %v202 = vld [vmem:[%s2 + $0xc] sm:$0xf]
      %v203 = vld [vmem:[%s2 + $0x10] sm:$0xf]
      %v204 = vld [vmem:[%s2 + $0x14] sm:$0xf]
      %v205 = vld [vmem:[%s2 + $0x18] sm:$0xf]
      %v206 = vld [vmem:[%s2 + $0x1c] sm:$0xf]
      %v210 = vunpack.c.l.b16 %v189
      %v211 = vunpack.c.l.b16 %v190
      %v212 = vunpack.c.l.b16 %v191
      %v213 = vpack.c.b16 %v211, %v210
      %v214 = vpack.c.b16 %v212, %v212
      %v223 = vunpack.c.l.b16 %v199
      %v224 = vunpack.c.l.b16 %v200
      %v225 = vunpack.c.l.b16 %v201
      %v226 = vunpack.c.l.b16 %v202
      %v227 = vunpack.c.l.b16 %v203
      %v228 = vunpack.c.l.b16 %v204
      %v229 = vunpack.c.l.b16 %v205
      %v230 = vunpack.c.l.b16 %v206
      %v231 = vpack.c.b16 %v224, %v223
      %v232 = vpack.c.b16 %v226, %v225
      %v233 = vpack.c.b16 %v228, %v227
      %v234 = vpack.c.b16 %v230, %v229
      %vm239 = vcmask 523264
      %v241 = vsel %vm239, %v213, 0
      %v244 = vsel %vm239, %v214, 0
      %246 = vmatpush.bf16.msra.mxu0 0
      %247 = vmatpush.bf16.msra.mxu0 0
      %248 = vmatpush.bf16.msra.mxu0 0
      %249 = vmatpush.bf16.msra.mxu0 0
      %250 = vmatpush.bf16.msra.mxu0 %v234
      %251 = vmatpush.bf16.msra.mxu0 %v233
      %252 = vmatpush.bf16.msra.mxu0 %v232
      %253 = vmatpush.bf16.msra.mxu0 %v231
      %254 = vmatmul.bf16.gmra.mxu0 %v241
      %v255 = vpop.f32.mrf.mxu0
      %v256 = vadd.f32 0.0, %v255
      %v257 = vpop.f32.mrf.mxu0
      %v258 = vadd.f32 0.0, %v257
      %259 = vmatmul.bf16.gmra.mxu0 %v244
      %v260 = vpop.f32.mrf.mxu0
      %v261 = vadd.f32 0.0, %v260
      %v262 = vpop.f32.mrf.mxu0
      %263 = vdwg.mxu0
      %vm267 = vcmask 1046528
      %v268 = vrot.slane %v256, 1
      %v269 = vrot.slane %v258, 1
      %v270 = vsel %vm267, %v268, %v269
      %v271 = vrot.slane %v261, 1
      %v272 = vsel %vm267, %v269, %v271
      %v277 = vadd.f32 %v195, %v268
      %v278 = vadd.f32 %v196, %v270
      %v279 = vadd.f32 %v197, %v272
      %v280 = vadd.f32 %v198, %v271
      %s281 = scalar_lea.vmem %s2, 32
      %v282 = vld [vmem:[%s281] sm:$0xf]
      %v283 = vld [vmem:[%s281 + $0x4] sm:$0xf]
      %v284 = vld [vmem:[%s281 + $0x8] sm:$0xf]
      %v285 = vld [vmem:[%s281 + $0xc] sm:$0xf]
      %v286 = vld [vmem:[%s281 + $0x10] sm:$0xf]
      %v287 = vld [vmem:[%s281 + $0x14] sm:$0xf]
      %v288 = vld [vmem:[%s281 + $0x18] sm:$0xf]
      %v289 = vld [vmem:[%s281 + $0x1c] sm:$0xf]
      %v291 = vunpack.c.l.b16 %v192
      %v292 = vpack.c.b16 %v291, %v212
      %vm293 = vsmask.f32 7424
      %v294 = vshrl.u32 %v213, 16
      %v296 = vshll.u32 %v213, 16
      %v298 = vrot.slane %v296, 1
      %v299 = vor.u32 %v294, %v298
      %v301 = vshll.u32 %v292, 16
      %v303 = vrot.slane %v301, 1
      %v304 = vsel %vm293, %v299, %v303
      %v305 = vshrl.u32 %v292, 16
      %v307 = vor.u32 %v305, %v303
      %v316 = vunpack.c.l.b16 %v282
      %v317 = vunpack.c.l.b16 %v283
      %v318 = vunpack.c.l.b16 %v284
      %v319 = vunpack.c.l.b16 %v285
      %v320 = vunpack.c.l.b16 %v286
      %v321 = vunpack.c.l.b16 %v287
      %v322 = vunpack.c.l.b16 %v288
      %v323 = vunpack.c.l.b16 %v289
      %v324 = vpack.c.b16 %v317, %v316
      %v325 = vpack.c.b16 %v319, %v318
      %v326 = vpack.c.b16 %v321, %v320
      %v327 = vpack.c.b16 %v323, %v322
      %v333 = vsel %vm239, %v304, 0
      %v336 = vsel %vm239, %v307, 0
      %338 = vmatpush.bf16.msra.mxu0 0
      %339 = vmatpush.bf16.msra.mxu0 0
      %340 = vmatpush.bf16.msra.mxu0 0
      %341 = vmatpush.bf16.msra.mxu0 0
      %342 = vmatpush.bf16.msra.mxu0 %v327
      %343 = vmatpush.bf16.msra.mxu0 %v326
      %344 = vmatpush.bf16.msra.mxu0 %v325
      %345 = vmatpush.bf16.msra.mxu0 %v324
      %346 = vmatmul.bf16.gmra.mxu0 %v333
      %v347 = vpop.f32.mrf.mxu0
      %v348 = vadd.f32 0.0, %v347
      %v349 = vpop.f32.mrf.mxu0
      %v350 = vadd.f32 0.0, %v349
      %351 = vmatmul.bf16.gmra.mxu0 %v336
      %v352 = vpop.f32.mrf.mxu0
      %v353 = vadd.f32 0.0, %v352
      %v354 = vpop.f32.mrf.mxu0
      %355 = vdwg.mxu0
      %v359 = vrot.slane %v348, 1
      %v360 = vrot.slane %v350, 1
      %v361 = vsel %vm267, %v359, %v360
      %v362 = vrot.slane %v353, 1
      %v363 = vsel %vm267, %v360, %v362
      %v368 = vadd.f32 %v277, %v359
      %v369 = vadd.f32 %v278, %v361
      %v370 = vadd.f32 %v279, %v363
      %v371 = vadd.f32 %v280, %v362
      %s372 = scalar_lea.vmem %s2, 64
      %v373 = vld [vmem:[%s372] sm:$0xf]
      %v374 = vld [vmem:[%s372 + $0x4] sm:$0xf]
      %v375 = vld [vmem:[%s372 + $0x8] sm:$0xf]
      %v376 = vld [vmem:[%s372 + $0xc] sm:$0xf]
      %v377 = vld [vmem:[%s372 + $0x10] sm:$0xf]
      %v378 = vld [vmem:[%s372 + $0x14] sm:$0xf]
      %v379 = vld [vmem:[%s372 + $0x18] sm:$0xf]
      %v380 = vld [vmem:[%s372 + $0x1c] sm:$0xf]
      %vm381 = vcmask 1046528
      %v382 = vrot.slane %v213, 1
      %v383 = vrot.slane %v292, 1
      %v384 = vsel %vm381, %v382, %v383
      %v393 = vunpack.c.l.b16 %v373
      %v394 = vunpack.c.l.b16 %v374
      %v395 = vunpack.c.l.b16 %v375
      %v396 = vunpack.c.l.b16 %v376
      %v397 = vunpack.c.l.b16 %v377
      %v398 = vunpack.c.l.b16 %v378
      %v399 = vunpack.c.l.b16 %v379
      %v400 = vunpack.c.l.b16 %v380
      %v401 = vpack.c.b16 %v394, %v393
      %v402 = vpack.c.b16 %v396, %v395
      %v403 = vpack.c.b16 %v398, %v397
      %v404 = vpack.c.b16 %v400, %v399
      %v410 = vsel %vm239, %v384, 0
      %v413 = vsel %vm239, %v383, 0
      %415 = vmatpush.bf16.msra.mxu0 0
      %416 = vmatpush.bf16.msra.mxu0 0
      %417 = vmatpush.bf16.msra.mxu0 0
      %418 = vmatpush.bf16.msra.mxu0 0
      %419 = vmatpush.bf16.msra.mxu0 %v404
      %420 = vmatpush.bf16.msra.mxu0 %v403
      %421 = vmatpush.bf16.msra.mxu0 %v402
      %422 = vmatpush.bf16.msra.mxu0 %v401
      %423 = vmatmul.bf16.gmra.mxu0 %v410
      %v424 = vpop.f32.mrf.mxu0
      %v425 = vadd.f32 0.0, %v424
      %v426 = vpop.f32.mrf.mxu0
      %v427 = vadd.f32 0.0, %v426
      %428 = vmatmul.bf16.gmra.mxu0 %v413
      %v429 = vpop.f32.mrf.mxu0
      %v430 = vadd.f32 0.0, %v429
      %v431 = vpop.f32.mrf.mxu0
      %432 = vdwg.mxu0
      %v436 = vrot.slane %v425, 1
      %v437 = vrot.slane %v427, 1
      %v438 = vsel %vm267, %v436, %v437
      %v439 = vrot.slane %v430, 1
      %v440 = vsel %vm267, %v437, %v439
      %v445 = vadd.f32 %v368, %v436
      %v446 = vadd.f32 %v369, %v438
      %v447 = vadd.f32 %v370, %v440
      %v448 = vadd.f32 %v371, %v439
      %s449 = scalar_lea.vmem %s2, 96
      %v450 = vld [vmem:[%s449] sm:$0xf]
      %v451 = vld [vmem:[%s449 + $0x4] sm:$0xf]
      %v452 = vld [vmem:[%s449 + $0x8] sm:$0xf]
      %v453 = vld [vmem:[%s449 + $0xc] sm:$0xf]
      %v454 = vld [vmem:[%s449 + $0x10] sm:$0xf]
      %v455 = vld [vmem:[%s449 + $0x14] sm:$0xf]
      %v456 = vld [vmem:[%s449 + $0x18] sm:$0xf]
      %v457 = vld [vmem:[%s449 + $0x1c] sm:$0xf]
      %vm458 = vcmask 1044480
      %v459 = vrot.slane %v213, 3
      %v460 = vrot.slane %v292, 3
      %v461 = vsel %vm458, %v459, %v460
      %v470 = vunpack.c.l.b16 %v450
      %v471 = vunpack.c.l.b16 %v451
      %v472 = vunpack.c.l.b16 %v452
      %v473 = vunpack.c.l.b16 %v453
      %v474 = vunpack.c.l.b16 %v454
      %v475 = vunpack.c.l.b16 %v455
      %v476 = vunpack.c.l.b16 %v456
      %v477 = vunpack.c.l.b16 %v457
      %v478 = vpack.c.b16 %v471, %v470
      %v479 = vpack.c.b16 %v473, %v472
      %v480 = vpack.c.b16 %v475, %v474
      %v481 = vpack.c.b16 %v477, %v476
      %v487 = vsel %vm239, %v461, 0
      %v490 = vsel %vm239, %v460, 0
      %492 = vmatpush.bf16.msra.mxu0 0
      %493 = vmatpush.bf16.msra.mxu0 0
      %494 = vmatpush.bf16.msra.mxu0 0
      %495 = vmatpush.bf16.msra.mxu0 0
      %496 = vmatpush.bf16.msra.mxu0 %v481
      %497 = vmatpush.bf16.msra.mxu0 %v480
      %498 = vmatpush.bf16.msra.mxu0 %v479
      %499 = vmatpush.bf16.msra.mxu0 %v478
      %500 = vmatmul.bf16.gmra.mxu0 %v487
      %v501 = vpop.f32.mrf.mxu0
      %v502 = vadd.f32 0.0, %v501
      %v503 = vpop.f32.mrf.mxu0
      %v504 = vadd.f32 0.0, %v503
      %505 = vmatmul.bf16.gmra.mxu0 %v490
      %v506 = vpop.f32.mrf.mxu0
      %v507 = vadd.f32 0.0, %v506
      %v508 = vpop.f32.mrf.mxu0
      %509 = vdwg.mxu0
      %v513 = vrot.slane %v502, 1
      %v514 = vrot.slane %v504, 1
      %v515 = vsel %vm267, %v513, %v514
      %v516 = vrot.slane %v507, 1
      %v517 = vsel %vm267, %v514, %v516
      %v522 = vadd.f32 %v445, %v513
      %v523 = vadd.f32 %v446, %v515
      %v524 = vadd.f32 %v447, %v517
      %v525 = vadd.f32 %v448, %v516
      %s526 = scalar_lea.vmem %s2, 128
      %v527 = vld [vmem:[%s526] sm:$0xf]
      %v528 = vld [vmem:[%s526 + $0x4] sm:$0xf]
      %v529 = vld [vmem:[%s526 + $0x8] sm:$0xf]
      %v530 = vld [vmem:[%s526 + $0xc] sm:$0xf]
      %v531 = vld [vmem:[%s526 + $0x10] sm:$0xf]
      %v532 = vld [vmem:[%s526 + $0x14] sm:$0xf]
      %v533 = vld [vmem:[%s526 + $0x18] sm:$0xf]
      %v534 = vld [vmem:[%s526 + $0x1c] sm:$0xf]
      %vm535 = vsmask.f32 4352
      %v536 = vrot.slane %v294, 3
      %v537 = vrot.slane %v296, 4
      %v538 = vor.u32 %v536, %v537
      %v539 = vrot.slane %v305, 3
      %v540 = vrot.slane %v301, 4
      %v541 = vor.u32 %v539, %v540
      %v542 = vsel %vm535, %v538, %v541
      %v551 = vunpack.c.l.b16 %v527
      %v552 = vunpack.c.l.b16 %v528
      %v553 = vunpack.c.l.b16 %v529
      %v554 = vunpack.c.l.b16 %v530
      %v555 = vunpack.c.l.b16 %v531
      %v556 = vunpack.c.l.b16 %v532
      %v557 = vunpack.c.l.b16 %v533
      %v558 = vunpack.c.l.b16 %v534
      %v559 = vpack.c.b16 %v552, %v551
      %v560 = vpack.c.b16 %v554, %v553
      %v561 = vpack.c.b16 %v556, %v555
      %v562 = vpack.c.b16 %v558, %v557
      %v568 = vsel %vm239, %v542, 0
      %v571 = vsel %vm239, %v541, 0
      %573 = vmatpush.bf16.msra.mxu0 0
      %574 = vmatpush.bf16.msra.mxu0 0
      %575 = vmatpush.bf16.msra.mxu0 0
      %576 = vmatpush.bf16.msra.mxu0 0
      %577 = vmatpush.bf16.msra.mxu0 %v562
      %578 = vmatpush.bf16.msra.mxu0 %v561
      %579 = vmatpush.bf16.msra.mxu0 %v560
      %580 = vmatpush.bf16.msra.mxu0 %v559
      %581 = vmatmul.bf16.gmra.mxu0 %v568
      %v582 = vpop.f32.mrf.mxu0
      %v583 = vadd.f32 0.0, %v582
      %v584 = vpop.f32.mrf.mxu0
      %v585 = vadd.f32 0.0, %v584
      %586 = vmatmul.bf16.gmra.mxu0 %v571
      %v587 = vpop.f32.mrf.mxu0
      %v588 = vadd.f32 0.0, %v587
      %v589 = vpop.f32.mrf.mxu0
      %590 = vdwg.mxu0
      %v594 = vrot.slane %v583, 1
      %v595 = vrot.slane %v585, 1
      %v596 = vsel %vm267, %v594, %v595
      %v597 = vrot.slane %v588, 1
      %v598 = vsel %vm267, %v595, %v597
      %v603 = vadd.f32 %v522, %v594
      %v604 = vadd.f32 %v523, %v596
      %v605 = vadd.f32 %v524, %v598
      %v606 = vadd.f32 %v525, %v597
      %s607 = scalar_lea.vmem %s2, 160
      %v608 = vld [vmem:[%s607] sm:$0xf]
      %v609 = vld [vmem:[%s607 + $0x4] sm:$0xf]
      %v610 = vld [vmem:[%s607 + $0x8] sm:$0xf]
      %v611 = vld [vmem:[%s607 + $0xc] sm:$0xf]
      %v612 = vld [vmem:[%s607 + $0x10] sm:$0xf]
      %v613 = vld [vmem:[%s607 + $0x14] sm:$0xf]
      %v614 = vld [vmem:[%s607 + $0x18] sm:$0xf]
      %v615 = vld [vmem:[%s607 + $0x1c] sm:$0xf]
      %v616 = vpack.c.b16 %v212, %v211
      %v617 = vpack.c.b16 %v291, %v291
      %v626 = vunpack.c.l.b16 %v608
      %v627 = vunpack.c.l.b16 %v609
      %v628 = vunpack.c.l.b16 %v610
      %v629 = vunpack.c.l.b16 %v611
      %v630 = vunpack.c.l.b16 %v612
      %v631 = vunpack.c.l.b16 %v613
      %v632 = vunpack.c.l.b16 %v614
      %v633 = vunpack.c.l.b16 %v615
      %v634 = vpack.c.b16 %v627, %v626
      %v635 = vpack.c.b16 %v629, %v628
      %v636 = vpack.c.b16 %v631, %v630
      %v637 = vpack.c.b16 %v633, %v632
      %v643 = vsel %vm239, %v616, 0
      %v646 = vsel %vm239, %v617, 0
      %648 = vmatpush.bf16.msra.mxu0 0
      %649 = vmatpush.bf16.msra.mxu0 0
      %650 = vmatpush.bf16.msra.mxu0 0
      %651 = vmatpush.bf16.msra.mxu0 0
      %652 = vmatpush.bf16.msra.mxu0 %v637
      %653 = vmatpush.bf16.msra.mxu0 %v636
      %654 = vmatpush.bf16.msra.mxu0 %v635
      %655 = vmatpush.bf16.msra.mxu0 %v634
      %656 = vmatmul.bf16.gmra.mxu0 %v643
      %v657 = vpop.f32.mrf.mxu0
      %v658 = vadd.f32 0.0, %v657
      %v659 = vpop.f32.mrf.mxu0
      %v660 = vadd.f32 0.0, %v659
      %661 = vmatmul.bf16.gmra.mxu0 %v646
      %v662 = vpop.f32.mrf.mxu0
      %v663 = vadd.f32 0.0, %v662
      %v664 = vpop.f32.mrf.mxu0
      %665 = vdwg.mxu0
      %v669 = vrot.slane %v658, 1
      %v670 = vrot.slane %v660, 1
      %v671 = vsel %vm267, %v669, %v670
      %v672 = vrot.slane %v663, 1
      %v673 = vsel %vm267, %v670, %v672
      %v678 = vadd.f32 %v603, %v669
      %v679 = vadd.f32 %v604, %v671
      %v680 = vadd.f32 %v605, %v673
      %v681 = vadd.f32 %v606, %v672
      %s682 = scalar_lea.vmem %s2, 192
      %v683 = vld [vmem:[%s682] sm:$0xf]
      %v684 = vld [vmem:[%s682 + $0x4] sm:$0xf]
      %v685 = vld [vmem:[%s682 + $0x8] sm:$0xf]
      %v686 = vld [vmem:[%s682 + $0xc] sm:$0xf]
      %v687 = vld [vmem:[%s682 + $0x10] sm:$0xf]
      %v688 = vld [vmem:[%s682 + $0x14] sm:$0xf]
      %v689 = vld [vmem:[%s682 + $0x18] sm:$0xf]
      %v690 = vld [vmem:[%s682 + $0x1c] sm:$0xf]
      %v692 = vunpack.c.l.b16 %v193
      %v693 = vpack.c.b16 %v692, %v291
      %vm694 = vcmask 1045504
      %v695 = vrot.slane %v616, 2
      %v696 = vrot.slane %v693, 2
      %v697 = vsel %vm694, %v695, %v696
      %v706 = vunpack.c.l.b16 %v683
      %v707 = vunpack.c.l.b16 %v684
      %v708 = vunpack.c.l.b16 %v685
      %v709 = vunpack.c.l.b16 %v686
      %v710 = vunpack.c.l.b16 %v687
      %v711 = vunpack.c.l.b16 %v688
      %v712 = vunpack.c.l.b16 %v689
      %v713 = vunpack.c.l.b16 %v690
      %v714 = vpack.c.b16 %v707, %v706
      %v715 = vpack.c.b16 %v709, %v708
      %v716 = vpack.c.b16 %v711, %v710
      %v717 = vpack.c.b16 %v713, %v712
      %v723 = vsel %vm239, %v697, 0
      %v726 = vsel %vm239, %v696, 0
      %728 = vmatpush.bf16.msra.mxu0 0
      %729 = vmatpush.bf16.msra.mxu0 0
      %730 = vmatpush.bf16.msra.mxu0 0
      %731 = vmatpush.bf16.msra.mxu0 0
      %732 = vmatpush.bf16.msra.mxu0 %v717
      %733 = vmatpush.bf16.msra.mxu0 %v716
      %734 = vmatpush.bf16.msra.mxu0 %v715
      %735 = vmatpush.bf16.msra.mxu0 %v714
      %736 = vmatmul.bf16.gmra.mxu0 %v723
      %v737 = vpop.f32.mrf.mxu0
      %v738 = vadd.f32 0.0, %v737
      %v739 = vpop.f32.mrf.mxu0
      %v740 = vadd.f32 0.0, %v739
      %741 = vmatmul.bf16.gmra.mxu0 %v726
      %v742 = vpop.f32.mrf.mxu0
      %v743 = vadd.f32 0.0, %v742
      %v744 = vpop.f32.mrf.mxu0
      %745 = vdwg.mxu0
      %v749 = vrot.slane %v738, 1
      %v750 = vrot.slane %v740, 1
      %v751 = vsel %vm267, %v749, %v750
      %v752 = vrot.slane %v743, 1
      %v753 = vsel %vm267, %v750, %v752
      %v758 = vadd.f32 %v678, %v749
      %v759 = vadd.f32 %v679, %v751
      %v760 = vadd.f32 %v680, %v753
      %v761 = vadd.f32 %v681, %v752
      %s762 = scalar_lea.vmem %s2, 224
      %v763 = vld [vmem:[%s762] sm:$0xf]
      %v764 = vld [vmem:[%s762 + $0x4] sm:$0xf]
      %v765 = vld [vmem:[%s762 + $0x8] sm:$0xf]
      %v766 = vld [vmem:[%s762 + $0xc] sm:$0xf]
      %v767 = vld [vmem:[%s762 + $0x10] sm:$0xf]
      %v768 = vld [vmem:[%s762 + $0x14] sm:$0xf]
      %v769 = vld [vmem:[%s762 + $0x18] sm:$0xf]
      %v770 = vld [vmem:[%s762 + $0x1c] sm:$0xf]
      %vm771 = vsmask.f32 5376
      %v772 = vshrl.u32 %v616, 16
      %v774 = vrot.slane %v772, 2
      %v775 = vshll.u32 %v616, 16
      %v777 = vrot.slane %v775, 3
      %v778 = vor.u32 %v774, %v777
      %v780 = vshrl.u32 %v693, 16
      %v782 = vrot.slane %v780, 2
      %v783 = vshll.u32 %v693, 16
      %v785 = vrot.slane %v783, 3
      %v786 = vor.u32 %v782, %v785
      %v787 = vsel %vm771, %v778, %v786
      %v796 = vunpack.c.l.b16 %v763
      %v797 = vunpack.c.l.b16 %v764
      %v798 = vunpack.c.l.b16 %v765
      %v799 = vunpack.c.l.b16 %v766
      %v800 = vunpack.c.l.b16 %v767
      %v801 = vunpack.c.l.b16 %v768
      %v802 = vunpack.c.l.b16 %v769
      %v803 = vunpack.c.l.b16 %v770
      %v804 = vpack.c.b16 %v797, %v796
      %v805 = vpack.c.b16 %v799, %v798
      %v806 = vpack.c.b16 %v801, %v800
      %v807 = vpack.c.b16 %v803, %v802
      %v813 = vsel %vm239, %v787, 0
      %v816 = vsel %vm239, %v786, 0
      %818 = vmatpush.bf16.msra.mxu0 0
      %819 = vmatpush.bf16.msra.mxu0 0
      %820 = vmatpush.bf16.msra.mxu0 0
      %821 = vmatpush.bf16.msra.mxu0 0
      %822 = vmatpush.bf16.msra.mxu0 %v807
      %823 = vmatpush.bf16.msra.mxu0 %v806
      %824 = vmatpush.bf16.msra.mxu0 %v805
      %825 = vmatpush.bf16.msra.mxu0 %v804
      %826 = vmatmul.bf16.gmra.mxu0 %v813
      %v827 = vpop.f32.mrf.mxu0
      %v828 = vadd.f32 0.0, %v827
      %v829 = vpop.f32.mrf.mxu0
      %v830 = vadd.f32 0.0, %v829
      %831 = vmatmul.bf16.gmra.mxu0 %v816
      %v832 = vpop.f32.mrf.mxu0
      %v833 = vadd.f32 0.0, %v832
      %v834 = vpop.f32.mrf.mxu0
      %835 = vdwg.mxu0
      %v839 = vrot.slane %v828, 1
      %v840 = vrot.slane %v830, 1
      %v841 = vsel %vm267, %v839, %v840
      %v842 = vrot.slane %v833, 1
      %v843 = vsel %vm267, %v840, %v842
      %v848 = vadd.f32 %v758, %v839
      %v849 = vadd.f32 %v759, %v841
      %v850 = vadd.f32 %v760, %v843
      %v851 = vadd.f32 %v761, %v842
      %s852 = scalar_lea.vmem %s2, 256
      %v853 = vld [vmem:[%s852] sm:$0xf]
      %v854 = vld [vmem:[%s852 + $0x4] sm:$0xf]
      %v855 = vld [vmem:[%s852 + $0x8] sm:$0xf]
      %v856 = vld [vmem:[%s852 + $0xc] sm:$0xf]
      %v857 = vld [vmem:[%s852 + $0x10] sm:$0xf]
      %v858 = vld [vmem:[%s852 + $0x14] sm:$0xf]
      %v859 = vld [vmem:[%s852 + $0x18] sm:$0xf]
      %v860 = vld [vmem:[%s852 + $0x1c] sm:$0xf]
      %v861 = vrot.slane %v616, 3
      %v862 = vrot.slane %v693, 3
      %v863 = vsel %vm458, %v861, %v862
      %v872 = vunpack.c.l.b16 %v853
      %v873 = vunpack.c.l.b16 %v854
      %v874 = vunpack.c.l.b16 %v855
      %v875 = vunpack.c.l.b16 %v856
      %v876 = vunpack.c.l.b16 %v857
      %v877 = vunpack.c.l.b16 %v858
      %v878 = vunpack.c.l.b16 %v859
      %v879 = vunpack.c.l.b16 %v860
      %v880 = vpack.c.b16 %v873, %v872
      %v881 = vpack.c.b16 %v875, %v874
      %v882 = vpack.c.b16 %v877, %v876
      %v883 = vpack.c.b16 %v879, %v878
      %v889 = vsel %vm239, %v863, 0
      %v892 = vsel %vm239, %v862, 0
      %894 = vmatpush.bf16.msra.mxu0 0
      %895 = vmatpush.bf16.msra.mxu0 0
      %896 = vmatpush.bf16.msra.mxu0 0
      %897 = vmatpush.bf16.msra.mxu0 0
      %898 = vmatpush.bf16.msra.mxu0 %v883
      %899 = vmatpush.bf16.msra.mxu0 %v882
      %900 = vmatpush.bf16.msra.mxu0 %v881
      %901 = vmatpush.bf16.msra.mxu0 %v880
      %902 = vmatmul.bf16.gmra.mxu0 %v889
      %v903 = vpop.f32.mrf.mxu0
      %v904 = vadd.f32 0.0, %v903
      %v905 = vpop.f32.mrf.mxu0
      %v906 = vadd.f32 0.0, %v905
      %907 = vmatmul.bf16.gmra.mxu0 %v892
      %v908 = vpop.f32.mrf.mxu0
      %v909 = vadd.f32 0.0, %v908
      %v910 = vpop.f32.mrf.mxu0
      %911 = vdwg.mxu0
      %v915 = vrot.slane %v904, 1
      %v916 = vrot.slane %v906, 1
      %v917 = vsel %vm267, %v915, %v916
      %v918 = vrot.slane %v909, 1
      %v919 = vsel %vm267, %v916, %v918
      %v924 = vadd.f32 %v848, %v915
      %v925 = vadd.f32 %v849, %v917
      %v926 = vadd.f32 %v850, %v919
      %v927 = vadd.f32 %v851, %v918
      %v928 = vpack.c.bf16 %v924, %v924
      %v929 = vpack.c.bf16 %v925, %v925
      %v930 = vpack.c.bf16 %v926, %v926
      %v931 = vpack.c.bf16 %v927, %v927
      %vm932 = vsmask.f32 256
      %vm933 = vsmask.f32 4368
      %vm934 = vmor %vm932, %vm933
      %v936 = vshrl.u32 %v928, 16
      %v938 = vrot.slane %v936, 7
      %v939 = vrot.slane %v938, 4
      %v941 = vshrl.u32 %v929, 16
      %v943 = vrot.slane %v941, 7
      %v944 = vshll.u32 %v929, 16
      %v946 = vor.u32 %v943, %v944
      %v947 = vsel %vm934, %v939, %v946
      %v948 = vrot.slane %v943, 4
      %v950 = vshrl.u32 %v930, 16
      %v952 = vrot.slane %v950, 7
      %v953 = vshll.u32 %v930, 16
      %v955 = vor.u32 %v952, %v953
      %v956 = vsel %vm934, %v948, %v955
      %v957 = vrot.slane %v952, 4
      %v959 = vshrl.u32 %v931, 16
      %v961 = vrot.slane %v959, 7
      %v962 = vshll.u32 %v931, 16
      %v964 = vor.u32 %v961, %v962
      %v965 = vsel %vm934, %v957, %v964
      %vm969 = vcmask 519168
      %970 = vst.msk [vmem:[%s171] sm:$0xf] %vm969, %v947
      %971 = vst.msk [vmem:[%s171 + $0x4] sm:$0xf] %vm969, %v956
      %972 = vst.msk [vmem:[%s171 + $0x8] sm:$0xf] %vm969, %v965
      %p973 = scmp.lt.s32.totalorder %s15, 1
      %s974 = scalar_select %p973, %s15, 1
      %s975 = smul.addr %s974, 3
      %s976 = smul.addr %s975, 4
      %s977 = scalar_lea.vmem %s3, %s976
      // Predicated region
      $region33: #{cell_forward.3} parent=31 // pred_check
        %p978 = pneg %p101
      $region34: #{cell_forward.3} parent=31 // pred_check_branch
        %980 = sbr.rel (%p978) target = $region36
      $region35: #{cell_forward.3} parent=31 // pred_region
        _
      $region36: #{cell_forward.3} parent=31 // pred_fallthru
        _
    $region32: #{cell_forward.3} parent=5 // pred_fallthru
      _
    %p981 = scmp.le.s32.totalorder 2, %s10
    // Predicated region
    $region37: #{cell_forward.3} parent=5 // pred_check
      %p982 = pneg %p981
    $region38: #{cell_forward.3} parent=5 // pred_check_branch
      %984 = sbr.rel (%p982) target = $region40
    $region39: #{cell_forward.3} parent=5 // pred_region
      %s985 = ssub.s32 %s10, 2
      // Predicated region
      $region41: #{cell_forward.3} parent=39 // pred_check
        %p986 = pneg %p107
      $region42: #{cell_forward.3} parent=39 // pred_check_branch
        %988 = sbr.rel (%p986) target = $region44
      $region43: #{cell_forward.3} parent=39 // pred_region
        %p989 = scmp.lt.s32.totalorder %s16, 1
        %s990 = scalar_select %p989, %s16, 1
        %s991 = smul.addr %s990, 3
        %s992 = smul.addr %s991, 4
        %s993 = scalar_lea.vmem %s3, %s992
      $region44: #{cell_forward.3} parent=39 // pred_fallthru
        _
    $region40: #{cell_forward.3} parent=5 // pred_fallthru
      _
  $region6: #{cell_forward.3} parent=0 // loop_footer
    %s14 = sadd.s32 1, %s10
  $region7: #{cell_forward.3} parent=0 // loop_footer_branch
    %9 = sbr.rel target = $region3
  $region8: #{cell_forward.3} parent=0 // loop_exit
    _

</llo_original>
